<compile_context>
chip_gen: v6e
topology: v6e:2x2x1
jax: 0.10.0
libtpu: 0.0.40
codegen_flags: <defaults>
</compile_context>

<pallas_src>
import functools
import math

import jax
import jax.numpy as jnp
import numpy as np
from jax.experimental import pallas as pl
from jax.experimental.pallas import tpu as pltpu

# Plain Python float: a module-level jnp scalar becomes a captured jaxpr
# constant inside Pallas kernels (the previous version's compile failure).
_NEG = -1e30


def _vmem_limit_bytes(default=32 * 1024 * 1024):
    """Generation-aware scoped-VMEM cap (headroom below physical VMEM)."""
    try:
        cap = int(pltpu.get_tpu_info().vmem_capacity_bytes)
    except Exception:
        return default
    if cap <= 48 * 1024 * 1024:
        return default
    # v7x (64 MiB) -> 48 MiB; v5e/v6e (128 MiB) -> 96 MiB.
    return max(default, min(cap - 16 * 1024 * 1024, 96 * 1024 * 1024))


# ----------------------------------------------------------------------------
# pass 1: (C, T) class scores, running max + critical-instance projection row
# ----------------------------------------------------------------------------
def _pass1_kernel(n_valid, emit_qv, x_ref, wi_ref, bi_ref, wqv_ref, bqv_ref,
                  cmax_ref, qsel_ref, *rest):
    t = pl.program_id(0)
    tile_n = x_ref.shape[0]
    x = x_ref[...]                                                      # (T, D) bf16

    # Class scores directly in lane-dense (C, T): contract D against the
    # resident (C, D) weight -> no post-matmul width-C slice / transpose.
    cls = jax.lax.dot_general(wi_ref[...], x, (((1,), (1,)), ((), ())),
                              preferred_element_type=jnp.float32) + bi_ref[...]
    lane = jax.lax.broadcasted_iota(jnp.int32, cls.shape, 1) + t * tile_n
    cls = jnp.where(lane < n_valid, cls, _NEG)

    # Fused projection (bf16 matmul, f32 accumulation): Q only, or [Q | V]
    # when pass 2 will stream this projection instead of re-reading X.
    proj = jnp.dot(x, wqv_ref[...], preferred_element_type=jnp.float32) + bqv_ref[...]
    if emit_qv:
        rest[0][...] = proj.astype(rest[0].dtype)                       # (T, 2H) bf16

    tmax = jnp.max(cls, axis=1, keepdims=True)                          # (C, 1)
    cand = jnp.where(cls == tmax, lane, 2 ** 30)
    amin = jnp.min(cand, axis=1, keepdims=True)                         # first argmax in tile
    onehot = (lane == amin).astype(jnp.float32)                         # (C, T)
    # Exact (0/1, f32) gather of the critical instance's projection row.
    row_sel = jnp.dot(onehot, proj, preferred_element_type=jnp.float32)  # (C, H|2H)

    @pl.when(t == 0)
    def _init():
        cmax_ref[...] = jnp.full_like(cmax_ref, _NEG)
        qsel_ref[...] = jnp.zeros_like(qsel_ref)

    # Strict > keeps the earlier tile on ties => global "first argmax".
    better = tmax > cmax_ref[...]                                       # (C, 1)
    cmax_ref[...] = jnp.where(better, tmax, cmax_ref[...])
    qsel_ref[...] = jnp.where(better, row_sel, qsel_ref[...])


# ----------------------------------------------------------------------------
# pass 2: attention scores, online softmax over instances, A^T V, logits
# ----------------------------------------------------------------------------
def _pass2_kernel(n_valid, hid, num_cls, reuse_proj, *refs):
    if reuse_proj:
        (qv_ref, qpad_ref, wfcc_ref, bfcc_ref, cmax_ref,
         st_ref, m_ref, l_ref, acc_ref, logits_ref) = refs
    else:
        (x_ref, w2_ref, b2_ref, qpad_ref, wfcc_ref, bfcc_ref, cmax_ref,
         st_ref, m_ref, l_ref, acc_ref, logits_ref) = refs

    t = pl.program_id(0)
    last = pl.num_programs(0) - 1
    tile_n = st_ref.shape[1]

    if reuse_proj:
        proj = qv_ref[...].astype(jnp.float32)                          # (T, 2H)
    else:
        proj = jnp.dot(x_ref[...], w2_ref[...],
                       preferred_element_type=jnp.float32) + b2_ref[...]  # (T, 2H)

    # scores[c, n] = <q_pad[c], proj[n]>  (q_pad = [q_max | 0], so the V half
    # contributes nothing and no in-kernel lane slicing is needed)
    s = jax.lax.dot_general(qpad_ref[...], proj, (((1,), (1,)), ((), ())),
                            preferred_element_type=jnp.float32)          # (C, T)
    s = s * (1.0 / math.sqrt(hid))
    lane = jax.lax.broadcasted_iota(jnp.int32, s.shape, 1) + t * tile_n
    s = jnp.where(lane < n_valid, s, _NEG)
    st_ref[...] = s                                  # lane-dense raw scores (C, T)

    @pl.when(t == 0)
    def _init():
        m_ref[...] = jnp.full_like(m_ref, _NEG)
        l_ref[...] = jnp.zeros_like(l_ref)
        acc_ref[...] = jnp.zeros_like(acc_ref)

    m_prev = m_ref[...]                                                  # (C, 1)
    m_new = jnp.maximum(m_prev, jnp.max(s, axis=1, keepdims=True))
    alpha = jnp.exp(m_prev - m_new)
    p = jnp.exp(s - m_new)                                               # (C, T)
    l_ref[...] = alpha * l_ref[...] + jnp.sum(p, axis=1, keepdims=True)
    acc_ref[...] = alpha * acc_ref[...] + jnp.dot(
        p, proj, preferred_element_type=jnp.float32)                     # (C, 2H)
    m_ref[...] = m_new

    @pl.when(t == last)
    def _finalize():
        # Normalize the bag embedding (exact divide: only (C, 1) values) and
        # fold Conv1d + 0.5*(bag + max_prediction) here so pass 3 stays pure.
        acc_n = acc_ref[...] * (1.0 / l_ref[...])                        # (C, 2H)
        acc_ref[...] = acc_n
        flat = jnp.concatenate(
            [acc_n[i:i + 1, :] for i in range(num_cls)], axis=1)         # (1, C*2H)
        bag = jnp.dot(flat, wfcc_ref[...],
                      preferred_element_type=jnp.float32) + bfcc_ref[...]  # (1, C)
        logits_ref[...] = 0.5 * (bag + cmax_ref[...])


# ----------------------------------------------------------------------------
# pass 3: normalize attention tiles (lane-dense, embarrassingly parallel)
# ----------------------------------------------------------------------------
def _attn_kernel(st_ref, m_ref, l_ref, at_ref):
    # Reciprocal is over (C, 1) values only -> exact divide costs nothing.
    at_ref[...] = jnp.exp(st_ref[...] - m_ref[...]) * (1.0 / l_ref[...])


# ----------------------------------------------------------------------------
# wrapper
# ----------------------------------------------------------------------------
def dsmil_forward(X, params, *, tile_n=1024):
    """DSMIL forward (use_feat_proj=False, eval mode).

    X: (1, N, D) float32.  Returns (logits (1, C), A (N, C), B (C, H)).

    tile_n: instance tile (rounded to a multiple of 128, clamped to the bag).
    Bigger tiles win: per-grid-step overhead dominates below ~512 rows.  Even
    on v7x (64 MiB VMEM) a double-buffered (1024, D<=2048) bf16 stream is
    <= 8 MiB, so 1024 is safe on every generation; use 2048+ on v5e/v6e for
    very large D.
    """
    assert X.shape[0] == 1
    feats = X[0]
    n, d = feats.shape
    c = params["wi"].shape[0]
    h = params["wq"].shape[0]

    # When D >> 2H, re-reading X and re-projecting Q in pass 2 is wasteful:
    # pass 1 emits the fused [Q|V] projection and pass 2 streams it instead.
    reuse_proj = d > 4 * h

    tile = max(128, -(-int(tile_n) // 128) * 128)
    tile = min(tile, -(-n // 128) * 128)            # don't over-pad small bags
    num_tiles = pl.cdiv(n, tile)
    n_pad = num_tiles * tile

    # bf16-first pad: one cast (+ optional pad) instead of f32 zeros/set/cast.
    x = feats.astype(jnp.bfloat16)
    if n_pad != n:
        x = jnp.pad(x, ((0, n_pad - n), (0, 0)))

    f32, bf16 = jnp.float32, jnp.bfloat16
    wi = params["wi"].astype(bf16)                                      # (C, D)
    bi = params["bi"].reshape(c, 1).astype(f32)                         # (C, 1)
    if reuse_proj:
        qw = 2 * h
        wqv = jnp.concatenate([params["wq"].T, params["wv"].T], axis=1).astype(bf16)
        bqv = jnp.concatenate([params["bq"], params["bv"]]).reshape(1, qw).astype(f32)
    else:
        qw = h
        wqv = params["wq"].T.astype(bf16)                               # (D, H)
        bqv = params["bq"].reshape(1, h).astype(f32)

    vmem_limit = _vmem_limit_bytes()
    cparams_red = pltpu.CompilerParams(dimension_semantics=("arbitrary",),
                                       vmem_limit_bytes=vmem_limit)
    cparams_par = pltpu.CompilerParams(dimension_semantics=("parallel",),
                                       vmem_limit_bytes=vmem_limit)
    resident = lambda shape: pl.BlockSpec(shape, lambda t: (0, 0))

    # --- pass 1 --------------------------------------------------------------
    p1_out_shape = [jax.ShapeDtypeStruct((c, 1), f32),
                    jax.ShapeDtypeStruct((c, qw), f32)]
    p1_out_specs = [resident((c, 1)), resident((c, qw))]
    if reuse_proj:
        p1_out_shape.append(jax.ShapeDtypeStruct((n_pad, qw), bf16))
        p1_out_specs.append(pl.BlockSpec((tile, qw), lambda t: (t, 0)))
    ce1 = pl.CostEstimate(
        flops=2 * n_pad * d * (c + qw) + 2 * n_pad * c * qw,
        transcendentals=0,
        bytes_accessed=n_pad * d * 2 + d * qw * 2 + c * d * 2
        + (n_pad * qw * 2 if reuse_proj else 0) + 4 * c * (qw + 1))
    res1 = pl.pallas_call(
        functools.partial(_pass1_kernel, n, reuse_proj),
        grid=(num_tiles,),
        in_specs=[pl.BlockSpec((tile, d), lambda t: (t, 0)),
                  resident((c, d)), resident((c, 1)),
                  resident((d, qw)), resident((1, qw))],
        out_specs=tuple(p1_out_specs),
        out_shape=tuple(p1_out_shape),
        compiler_params=cparams_red,
        cost_estimate=ce1,
    )(x, wi, bi, wqv, bqv)
    if reuse_proj:
        cmax, qsel, qv = res1
        q_max = qsel[:, :h]                                             # (C, H)
    else:
        cmax, qsel = res1
        q_max = qsel

    # q_pad = [q_max | 0]: pass 2 contracts the whole [Q | V] projection and
    # the V half contributes nothing (no unaligned in-kernel lane slicing).
    q_pad = jnp.concatenate([q_max, jnp.zeros((c, h), f32)], axis=1)    # (C, 2H)
    # Conv1d(C, C, kernel=H) as one flattened (1, C*2H) @ (C*2H, C) contraction
    # with the Q-half rows zeroed, so the kernel can use the full (C, 2H) bag.
    wfcc_pad = (jnp.zeros((c, 2 * h, c), f32)
                .at[:, h:, :].set(jnp.transpose(params["wfcc"], (1, 2, 0)).astype(f32))
                .reshape(c * 2 * h, c))
    bfcc = params["bfcc"].reshape(1, c).astype(f32)
    cmax_row = cmax.reshape(1, c)

    # --- pass 2 --------------------------------------------------------------
    common_in_specs = [resident((c, 2 * h)), resident((c * 2 * h, c)),
                       resident((1, c)), resident((1, c))]
    if reuse_proj:
        in_specs = [pl.BlockSpec((tile, 2 * h), lambda t: (t, 0))] + common_in_specs
        args2 = (qv, q_pad, wfcc_pad, bfcc, cmax_row)
        stream_bytes = n_pad * 2 * h * 2
        proj_flops = 0
    else:
        w2 = jnp.concatenate([params["wq"].T, params["wv"].T], axis=1).astype(bf16)
        b2 = jnp.concatenate([params["bq"], params["bv"]]).reshape(1, 2 * h).astype(f32)
        in_specs = [pl.BlockSpec((tile, d), lambda t: (t, 0)),
                    resident((d, 2 * h)), resident((1, 2 * h))] + common_in_specs
        args2 = (x, w2, b2, q_pad, wfcc_pad, bfcc, cmax_row)
        stream_bytes = n_pad * d * 2 + d * 2 * h * 2
        proj_flops = 2 * n_pad * d * 2 * h
    ce2 = pl.CostEstimate(
        flops=proj_flops + 4 * n_pad * c * 2 * h,
        transcendentals=n_pad * c,
        bytes_accessed=stream_bytes + n_pad * c * 4
        + 4 * c * (2 * h + 2 + 2 * h * c))
    st, m, l, acc, logits = pl.pallas_call(
        functools.partial(_pass2_kernel, n, h, c, reuse_proj),
        grid=(num_tiles,),
        in_specs=in_specs,
        out_specs=(pl.BlockSpec((c, tile), lambda t: (0, t)),
                   resident((c, 1)), resident((c, 1)),
                   resident((c, 2 * h)), resident((1, c))),
        out_shape=(jax.ShapeDtypeStruct((c, n_pad), f32),
                   jax.ShapeDtypeStruct((c, 1), f32),
                   jax.ShapeDtypeStruct((c, 1), f32),
                   jax.ShapeDtypeStruct((c, 2 * h), f32),
                   jax.ShapeDtypeStruct((1, c), f32)),
        compiler_params=cparams_red,
        cost_estimate=ce2,
    )(*args2)

    # --- pass 3: attention normalization (pure -> "parallel" on v7x) --------
    ce3 = pl.CostEstimate(flops=2 * n_pad * c, transcendentals=n_pad * c,
                          bytes_accessed=2 * n_pad * c * 4)
    a_t = pl.pallas_call(
        _attn_kernel,
        grid=(num_tiles,),
        in_specs=[pl.BlockSpec((c, tile), lambda t: (0, t)),
                  resident((c, 1)), resident((c, 1))],
        out_specs=pl.BlockSpec((c, tile), lambda t: (0, t)),
        out_shape=jax.ShapeDtypeStruct((c, n_pad), f32),
        compiler_params=cparams_par,
        cost_estimate=ce3,
    )(st, m, l)

    bag_B = acc[:, h:]                               # (C, H) = normalized A^T V
    # Kernel-native attention layout is lane-dense (C, N); transpose only
    # because the module's API returns A as (N, C).
    A = a_t[:, :n].T
    return logits, A, bag_B


# ----------------------------------------------------------------------------
# pure-JAX reference (mirrors the PyTorch eval forward; it uses the same
# bf16-input / f32-accumulate policy as the kernels so the comparison isolates
# kernel bugs rather than bf16 rounding).
# ----------------------------------------------------------------------------
def dsmil_reference(X, params, *, reuse_proj=False):
    feats = X[0].astype(jnp.float32)
    xb = feats.astype(jnp.bfloat16)
    classes = jnp.dot(xb, params["wi"].T.astype(jnp.bfloat16),
                      preferred_element_type=jnp.float32) + params["bi"]
    Q = jnp.dot(xb, params["wq"].T.astype(jnp.bfloat16),
                preferred_element_type=jnp.float32) + params["bq"]
    V = jnp.dot(xb, params["wv"].T.astype(jnp.bfloat16),
                preferred_element_type=jnp.float32) + params["bv"]
    # NOTE: tie-break = first index of the column max (jnp.argmax); torch.sort
    # descending is not stable, so exact ties could differ (benign).
    m_idx = jnp.argmax(classes, axis=0)
    q_max = Q[m_idx]                                  # f32 critical rows (as in kernel)
    if reuse_proj:
        # The kernel streams the fused [Q|V] projection through HBM in bf16.
        Q = Q.astype(jnp.bfloat16).astype(jnp.float32)
        V = V.astype(jnp.bfloat16).astype(jnp.float32)
    A = jax.nn.softmax((Q @ q_max.T) / jnp.sqrt(jnp.float32(Q.shape[1])), axis=0)
    B = A.T @ V
    Cbag = jnp.einsum("oik,ik->o", params["wfcc"], B) + params["bfcc"]
    logits = 0.5 * (Cbag[None, :] + jnp.max(classes, axis=0)[None, :])
    return logits, A, B


def init_params(key, dim_in, dim_hid, num_cls):
    ks = jax.random.split(key, 8)
    s_in = 1.0 / np.sqrt(dim_in)
    s_h = 1.0 / np.sqrt(num_cls * dim_hid)
    return {
        "wi":   jax.random.uniform(ks[0], (num_cls, dim_in), jnp.float32, -s_in, s_in),
        "bi":   jax.random.uniform(ks[1], (num_cls,), jnp.float32, -s_in, s_in),
        "wq":   jax.random.uniform(ks[2], (dim_hid, dim_in), jnp.float32, -s_in, s_in),
        "bq":   jax.random.uniform(ks[3], (dim_hid,), jnp.float32, -s_in, s_in),
        "wv":   jax.random.uniform(ks[4], (dim_hid, dim_in), jnp.float32, -s_in, s_in),
        "bv":   jax.random.uniform(ks[5], (dim_hid,), jnp.float32, -s_in, s_in),
        "wfcc": jax.random.uniform(ks[6], (num_cls, num_cls, dim_hid), jnp.float32, -s_h, s_h),
        "bfcc": jax.random.uniform(ks[7], (num_cls,), jnp.float32, -s_h, s_h),
    }


if __name__ == "__main__":
    def _check(dim_in, dim_hid, num_cls, n_inst, tile_n):
        key = jax.random.PRNGKey(0)
        k_x, k_p = jax.random.split(key)
        X = jax.random.normal(k_x, (1, n_inst, dim_in), dtype=jnp.float32)
        params = init_params(k_p, dim_in, dim_hid, num_cls)

        fwd = jax.jit(functools.partial(dsmil_forward, tile_n=tile_n))
        logits, A, B = fwd(X, params)
        jax.block_until_ready((logits, A, B))

        reuse = dim_in > 4 * dim_hid
        ref_logits, ref_A, ref_B = dsmil_reference(X, params, reuse_proj=reuse)
        np.testing.assert_allclose(np.asarray(logits), np.asarray(ref_logits),
                                   rtol=2e-3, atol=2e-3)
        np.testing.assert_allclose(np.asarray(A), np.asarray(ref_A),
                                   rtol=2e-3, atol=2e-3)
        np.testing.assert_allclose(np.asarray(B), np.asarray(ref_B),
                                   rtol=2e-3, atol=2e-3)

    # config 1: D <= 4H  -> pass 2 re-projects [Q|V] from X.
    _check(dim_in=128, dim_hid=64, num_cls=2, n_inst=300, tile_n=1024)
    # config 2: D > 4H   -> pass 1 emits the [Q|V] projection, pass 2 streams it.
    _check(dim_in=512, dim_hid=64, num_cls=2, n_inst=300, tile_n=1024)

    print("KERNEL_OK")
</pallas_src>

<mosaic_0001>
module attributes {stable_mosaic.version = 11 : i64} {
  func.func @_pass2_kernel(%arg0: i32, %arg1: memref<384x128xbf16, #tpu.memory_space<vmem>>, %arg2: memref<128x128xbf16, #tpu.memory_space<vmem>>, %arg3: memref<1x128xf32, #tpu.memory_space<vmem>>, %arg4: memref<2x128xf32, #tpu.memory_space<vmem>>, %arg5: memref<256x2xf32, #tpu.memory_space<vmem>>, %arg6: memref<1x2xf32, #tpu.memory_space<vmem>>, %arg7: memref<1x2xf32, #tpu.memory_space<vmem>>, %arg8: memref<2x384xf32, #tpu.memory_space<vmem>>, %arg9: memref<2x1xf32, #tpu.memory_space<vmem>>, %arg10: memref<2x1xf32, #tpu.memory_space<vmem>>, %arg11: memref<2x128xf32, #tpu.memory_space<vmem>>, %arg12: memref<1x2xf32, #tpu.memory_space<vmem>>) attributes {dimension_semantics = [#tpu.dimension_semantics<arbitrary>], iteration_bounds = array<i64: 1>, scalar_prefetch = 0 : i64, scratch_operands = 0 : i64, tpu.core_type = #tpu.core_type<tc>, window_params = [{transform_indices = @transform_0, window_bounds = array<i64: 384, 128>}, {pipeline_mode = #tpu.pipeline_mode<synchronous>, transform_indices = @transform_1, window_bounds = array<i64: 128, 128>}, {pipeline_mode = #tpu.pipeline_mode<synchronous>, transform_indices = @transform_2, window_bounds = array<i64: 1, 128>}, {pipeline_mode = #tpu.pipeline_mode<synchronous>, transform_indices = @transform_3, window_bounds = array<i64: 2, 128>}, {pipeline_mode = #tpu.pipeline_mode<synchronous>, transform_indices = @transform_4, window_bounds = array<i64: 256, 2>}, {pipeline_mode = #tpu.pipeline_mode<synchronous>, transform_indices = @transform_5, window_bounds = array<i64: 1, 2>}, {pipeline_mode = #tpu.pipeline_mode<synchronous>, transform_indices = @transform_6, window_bounds = array<i64: 1, 2>}, {transform_indices = @transform_7, window_bounds = array<i64: 2, 384>}, {pipeline_mode = #tpu.pipeline_mode<synchronous>, transform_indices = @transform_8, window_bounds = array<i64: 2, 1>}, {pipeline_mode = #tpu.pipeline_mode<synchronous>, transform_indices = @transform_9, window_bounds = array<i64: 2, 1>}, {pipeline_mode = #tpu.pipeline_mode<synchronous>, transform_indices = @transform_10, window_bounds = array<i64: 2, 128>}, {pipeline_mode = #tpu.pipeline_mode<synchronous>, transform_indices = @transform_11, window_bounds = array<i64: 1, 2>}]} {
    %c0 = arith.constant 0 : index
    %c0_0 = arith.constant 0 : index
    %0 = vector.load %arg1[%c0, %c0_0] : memref<384x128xbf16, #tpu.memory_space<vmem>>, vector<384x128xbf16>
    %c0_1 = arith.constant 0 : index
    %c0_2 = arith.constant 0 : index
    %1 = vector.load %arg2[%c0_1, %c0_2] : memref<128x128xbf16, #tpu.memory_space<vmem>>, vector<128x128xbf16>
    %cst = arith.constant dense<0.000000e+00> : vector<384x128xf32>
    %2 = tpu.matmul %0, %1, %cst {dimension_numbers = #tpu.dot_dimension_numbers<[1], [0], [0], [1], [0, 0, 1, 1], [], []>} : vector<384x128xbf16>, vector<128x128xbf16>, vector<384x128xf32> -> vector<384x128xf32>
    %c0_3 = arith.constant 0 : index
    %c0_4 = arith.constant 0 : index
    %3 = vector.load %arg3[%c0_3, %c0_4] : memref<1x128xf32, #tpu.memory_space<vmem>>, vector<1x128xf32>
    %4 = vector.broadcast %3 : vector<1x128xf32> to vector<384x128xf32>
    %5 = arith.addf %2, %4 : vector<384x128xf32>
    %c0_5 = arith.constant 0 : index
    %c0_6 = arith.constant 0 : index
    %6 = vector.load %arg4[%c0_5, %c0_6] : memref<2x128xf32, #tpu.memory_space<vmem>>, vector<2x128xf32>
    %cst_7 = arith.constant dense<0.000000e+00> : vector<2x384xf32>
    %7 = tpu.matmul %6, %5, %cst_7 {dimension_numbers = #tpu.dot_dimension_numbers<[1], [1], [0], [0], [0, 0, 1, 0], [], []>} : vector<2x128xf32>, vector<384x128xf32>, vector<2x384xf32> -> vector<2x384xf32>
    %cst_8 = arith.constant 1.250000e-01 : f32
    %8 = vector.broadcast %cst_8 : f32 to vector<2x384xf32>
    %9 = arith.mulf %7, %8 : vector<2x384xf32>
    %10 = tpu.iota {dimensions = array<i32: 1>} : vector<2x384xi32>
    %c384_i32 = arith.constant 384 : i32
    %11 = arith.muli %arg0, %c384_i32 : i32
    %12 = vector.broadcast %11 : i32 to vector<2x384xi32>
    %13 = arith.addi %10, %12 : vector<2x384xi32>
    %c300_i32 = arith.constant 300 : i32
    %14 = vector.broadcast %c300_i32 : i32 to vector<2x384xi32>
    %15 = arith.cmpi slt, %13, %14 : vector<2x384xi32>
    %cst_9 = arith.constant -1.000000e+30 : f32
    %16 = vector.broadcast %cst_9 : f32 to vector<2x384xf32>
    %17 = arith.select %15, %9, %16 : vector<2x384xi1>, vector<2x384xf32>
    %c0_10 = arith.constant 0 : index
    %c0_11 = arith.constant 0 : index
    %18 = vector.load %arg8[%c0_10, %c0_11] : memref<2x384xf32, #tpu.memory_space<vmem>>, vector<2x384xf32>
    tpu.vector_store %arg8[%c0_10, %c0_11], %17 {strides = array<i32>} : memref<2x384xf32, #tpu.memory_space<vmem>>, vector<2x384xf32>,
    %c0_i32 = arith.constant 0 : i32
    %19 = arith.cmpi eq, %arg0, %c0_i32 : i32
    %20 = arith.extui %19 : i1 to i32
    %c0_i32_12 = arith.constant 0 : i32
    %21 = arith.cmpi ne, %20, %c0_i32_12 : i32
    scf.if %21 {
      %cst_30 = arith.constant -1.000000e+30 : f32
      %47 = vector.broadcast %cst_30 : f32 to vector<2x1xf32>
      %c0_31 = arith.constant 0 : index
      %c0_32 = arith.constant 0 : index
      %48 = vector.load %arg9[%c0_31, %c0_32] : memref<2x1xf32, #tpu.memory_space<vmem>>, vector<2x1xf32>
      tpu.vector_store %arg9[%c0_31, %c0_32], %47 {strides = array<i32>} : memref<2x1xf32, #tpu.memory_space<vmem>>, vector<2x1xf32>,
      %cst_33 = arith.constant 0.000000e+00 : f32
      %49 = vector.broadcast %cst_33 : f32 to vector<2x1xf32>
      %c0_34 = arith.constant 0 : index
      %c0_35 = arith.constant 0 : index
      %50 = vector.load %arg10[%c0_34, %c0_35] : memref<2x1xf32, #tpu.memory_space<vmem>>, vector<2x1xf32>
      tpu.vector_store %arg10[%c0_34, %c0_35], %49 {strides = array<i32>} : memref<2x1xf32, #tpu.memory_space<vmem>>, vector<2x1xf32>,
      %cst_36 = arith.constant 0.000000e+00 : f32
      %51 = vector.broadcast %cst_36 : f32 to vector<2x128xf32>
      %c0_37 = arith.constant 0 : index
      %c0_38 = arith.constant 0 : index
      %52 = vector.load %arg11[%c0_37, %c0_38] : memref<2x128xf32, #tpu.memory_space<vmem>>, vector<2x128xf32>
      tpu.vector_store %arg11[%c0_37, %c0_38], %51 {strides = array<i32>} : memref<2x128xf32, #tpu.memory_space<vmem>>, vector<2x128xf32>,
    } else {
    }
    %c0_13 = arith.constant 0 : index
    %c0_14 = arith.constant 0 : index
    %22 = vector.load %arg9[%c0_13, %c0_14] : memref<2x1xf32, #tpu.memory_space<vmem>>, vector<2x1xf32>
    %cst_15 = arith.constant dense<0xFF800000> : vector<2xf32>
    %23 = vector.multi_reduction <maximumf>, %17, %cst_15 [1] : vector<2x384xf32> to vector<2xf32>
    %24 = vector.shape_cast %23 : vector<2xf32> to vector<2x1xf32>
    %25 = arith.maximumf %22, %24 : vector<2x1xf32>
    %26 = arith.subf %22, %25 : vector<2x1xf32>
    %27 = math.exp %26 : vector<2x1xf32>
    %28 = vector.broadcast %25 : vector<2x1xf32> to vector<2x384xf32>
    %29 = arith.subf %17, %28 : vector<2x384xf32>
    %30 = math.exp %29 : vector<2x384xf32>
    %c0_16 = arith.constant 0 : index
    %c0_17 = arith.constant 0 : index
    %31 = vector.load %arg10[%c0_16, %c0_17] : memref<2x1xf32, #tpu.memory_space<vmem>>, vector<2x1xf32>
    %32 = arith.mulf %27, %31 : vector<2x1xf32>
    %cst_18 = arith.constant dense<0.000000e+00> : vector<2xf32>
    %33 = vector.multi_reduction <add>, %30, %cst_18 [1] : vector<2x384xf32> to vector<2xf32>
    %34 = vector.shape_cast %33 : vector<2xf32> to vector<2x1xf32>
    %35 = arith.addf %32, %34 : vector<2x1xf32>
    %c0_19 = arith.constant 0 : index
    %c0_20 = arith.constant 0 : index
    %36 = vector.load %arg10[%c0_19, %c0_20] : memref<2x1xf32, #tpu.memory_space<vmem>>, vector<2x1xf32>
    tpu.vector_store %arg10[%c0_19, %c0_20], %35 {strides = array<i32>} : memref<2x1xf32, #tpu.memory_space<vmem>>, vector<2x1xf32>,
    %c0_21 = arith.constant 0 : index
    %c0_22 = arith.constant 0 : index
    %37 = vector.load %arg11[%c0_21, %c0_22] : memref<2x128xf32, #tpu.memory_space<vmem>>, vector<2x128xf32>
    %38 = vector.broadcast %27 : vector<2x1xf32> to vector<2x128xf32>
    %39 = arith.mulf %38, %37 : vector<2x128xf32>
    %cst_23 = arith.constant dense<0.000000e+00> : vector<2x128xf32>
    %40 = tpu.matmul %30, %5, %cst_23 {dimension_numbers = #tpu.dot_dimension_numbers<[1], [0], [0], [1], [0, 0, 1, 1], [], []>} : vector<2x384xf32>, vector<384x128xf32>, vector<2x128xf32> -> vector<2x128xf32>
    %41 = arith.addf %39, %40 : vector<2x128xf32>
    %c0_24 = arith.constant 0 : index
    %c0_25 = arith.constant 0 : index
    %42 = vector.load %arg11[%c0_24, %c0_25] : memref<2x128xf32, #tpu.memory_space<vmem>>, vector<2x128xf32>
    tpu.vector_store %arg11[%c0_24, %c0_25], %41 {strides = array<i32>} : memref<2x128xf32, #tpu.memory_space<vmem>>, vector<2x128xf32>,
    %c0_26 = arith.constant 0 : index
    %c0_27 = arith.constant 0 : index
    %43 = vector.load %arg9[%c0_26, %c0_27] : memref<2x1xf32, #tpu.memory_space<vmem>>, vector<2x1xf32>
    tpu.vector_store %arg9[%c0_26, %c0_27], %25 {strides = array<i32>} : memref<2x1xf32, #tpu.memory_space<vmem>>, vector<2x1xf32>,
    %c0_i32_28 = arith.constant 0 : i32
    %44 = arith.cmpi eq, %arg0, %c0_i32_28 : i32
    %45 = arith.extui %44 : i1 to i32
    %c0_i32_29 = arith.constant 0 : i32
    %46 = arith.cmpi ne, %45, %c0_i32_29 : i32
    scf.if %46 {
      %c0_30 = arith.constant 0 : index
      %c0_31 = arith.constant 0 : index
      %47 = vector.load %arg11[%c0_30, %c0_31] : memref<2x128xf32, #tpu.memory_space<vmem>>, vector<2x128xf32>
      %c0_32 = arith.constant 0 : index
      %c0_33 = arith.constant 0 : index
      %48 = vector.load %arg10[%c0_32, %c0_33] : memref<2x1xf32, #tpu.memory_space<vmem>>, vector<2x1xf32>
      %cst_34 = arith.constant 1.000000e+00 : f32
      %49 = vector.broadcast %cst_34 : f32 to vector<2x1xf32>
      %50 = arith.divf %49, %48 : vector<2x1xf32>
      %51 = vector.broadcast %50 : vector<2x1xf32> to vector<2x128xf32>
      %52 = arith.mulf %47, %51 : vector<2x128xf32>
      %c0_35 = arith.constant 0 : index
      %c0_36 = arith.constant 0 : index
      %53 = vector.load %arg11[%c0_35, %c0_36] : memref<2x128xf32, #tpu.memory_space<vmem>>, vector<2x128xf32>
      tpu.vector_store %arg11[%c0_35, %c0_36], %52 {strides = array<i32>} : memref<2x128xf32, #tpu.memory_space<vmem>>, vector<2x128xf32>,
      %54 = vector.extract_strided_slice %52 {offsets = [0, 0], sizes = [1, 128], strides = [1, 1]} : vector<2x128xf32> to vector<1x128xf32>
      %55 = vector.extract_strided_slice %52 {offsets = [1, 0], sizes = [1, 128], strides = [1, 1]} : vector<2x128xf32> to vector<1x128xf32>
      %56 = tpu.concatenate %54, %55 in 1 : vector<1x128xf32>, vector<1x128xf32> -> vector<1x256xf32>
      %c0_37 = arith.constant 0 : index
      %c0_38 = arith.constant 0 : index
      %57 = vector.load %arg5[%c0_37, %c0_38] : memref<256x2xf32, #tpu.memory_space<vmem>>, vector<256x2xf32>
      %cst_39 = arith.constant dense<0.000000e+00> : vector<1x2xf32>
      %58 = tpu.matmul %56, %57, %cst_39 {dimension_numbers = #tpu.dot_dimension_numbers<[1], [0], [0], [1], [0, 0, 1, 1], [], []>} : vector<1x256xf32>, vector<256x2xf32>, vector<1x2xf32> -> vector<1x2xf32>
      %c0_40 = arith.constant 0 : index
      %c0_41 = arith.constant 0 : index
      %59 = vector.load %arg6[%c0_40, %c0_41] : memref<1x2xf32, #tpu.memory_space<vmem>>, vector<1x2xf32>
      %60 = arith.addf %58, %59 : vector<1x2xf32>
      %c0_42 = arith.constant 0 : index
      %c0_43 = arith.constant 0 : index
      %61 = vector.load %arg7[%c0_42, %c0_43] : memref<1x2xf32, #tpu.memory_space<vmem>>, vector<1x2xf32>
      %62 = arith.addf %60, %61 : vector<1x2xf32>
      %cst_44 = arith.constant 5.000000e-01 : f32
      %63 = vector.broadcast %cst_44 : f32 to vector<1x2xf32>
      %64 = arith.mulf %63, %62 : vector<1x2xf32>
      %c0_45 = arith.constant 0 : index
      %c0_46 = arith.constant 0 : index
      %65 = vector.load %arg12[%c0_45, %c0_46] : memref<1x2xf32, #tpu.memory_space<vmem>>, vector<1x2xf32>
      tpu.vector_store %arg12[%c0_45, %c0_46], %64 {strides = array<i32>} : memref<1x2xf32, #tpu.memory_space<vmem>>, vector<1x2xf32>,
    } else {
    }
    return
  }
  func.func @transform_0(%arg0: i32) -> (i32, i32) {
    %c0_i32 = arith.constant 0 : i32
    %c0_i32_0 = arith.constant 0 : i32
    return %arg0, %c0_i32 : i32, i32
  }
  func.func @transform_1(%arg0: i32) -> (i32, i32) {
    %c0_i32 = arith.constant 0 : i32
    %c0_i32_0 = arith.constant 0 : i32
    %c0_i32_1 = arith.constant 0 : i32
    return %c0_i32, %c0_i32_0 : i32, i32
  }
  func.func @transform_2(%arg0: i32) -> (i32, i32) {
    %c0_i32 = arith.constant 0 : i32
    %c0_i32_0 = arith.constant 0 : i32
    %c0_i32_1 = arith.constant 0 : i32
    return %c0_i32, %c0_i32_0 : i32, i32
  }
  func.func @transform_3(%arg0: i32) -> (i32, i32) {
    %c0_i32 = arith.constant 0 : i32
    %c0_i32_0 = arith.constant 0 : i32
    %c0_i32_1 = arith.constant 0 : i32
    return %c0_i32, %c0_i32_0 : i32, i32
  }
  func.func @transform_4(%arg0: i32) -> (i32, i32) {
    %c0_i32 = arith.constant 0 : i32
    %c0_i32_0 = arith.constant 0 : i32
    %c0_i32_1 = arith.constant 0 : i32
    return %c0_i32, %c0_i32_0 : i32, i32
  }
  func.func @transform_5(%arg0: i32) -> (i32, i32) {
    %c0_i32 = arith.constant 0 : i32
    %c0_i32_0 = arith.constant 0 : i32
    %c0_i32_1 = arith.constant 0 : i32
    return %c0_i32, %c0_i32_0 : i32, i32
  }
  func.func @transform_6(%arg0: i32) -> (i32, i32) {
    %c0_i32 = arith.constant 0 : i32
    %c0_i32_0 = arith.constant 0 : i32
    %c0_i32_1 = arith.constant 0 : i32
    return %c0_i32, %c0_i32_0 : i32, i32
  }
  func.func @transform_7(%arg0: i32) -> (i32, i32) {
    %c0_i32 = arith.constant 0 : i32
    %c0_i32_0 = arith.constant 0 : i32
    return %c0_i32, %arg0 : i32, i32
  }
  func.func @transform_8(%arg0: i32) -> (i32, i32) {
    %c0_i32 = arith.constant 0 : i32
    %c0_i32_0 = arith.constant 0 : i32
    %c0_i32_1 = arith.constant 0 : i32
    return %c0_i32, %c0_i32_0 : i32, i32
  }
  func.func @transform_9(%arg0: i32) -> (i32, i32) {
    %c0_i32 = arith.constant 0 : i32
    %c0_i32_0 = arith.constant 0 : i32
    %c0_i32_1 = arith.constant 0 : i32
    return %c0_i32, %c0_i32_0 : i32, i32
  }
  func.func @transform_10(%arg0: i32) -> (i32, i32) {
    %c0_i32 = arith.constant 0 : i32
    %c0_i32_0 = arith.constant 0 : i32
    %c0_i32_1 = arith.constant 0 : i32
    return %c0_i32, %c0_i32_0 : i32, i32
  }
  func.func @transform_11(%arg0: i32) -> (i32, i32) {
    %c0_i32 = arith.constant 0 : i32
    %c0_i32_0 = arith.constant 0 : i32
    %c0_i32_1 = arith.constant 0 : i32
    return %c0_i32, %c0_i32_0 : i32, i32
  }
}

module attributes {stable_mosaic.version = 11 : i64} {
  func.func @_pass1_kernel(%arg0: i32, %arg1: memref<384x128xbf16, #tpu.memory_space<vmem>>, %arg2: memref<2x128xbf16, #tpu.memory_space<vmem>>, %arg3: memref<2x1xf32, #tpu.memory_space<vmem>>, %arg4: memref<128x64xbf16, #tpu.memory_space<vmem>>, %arg5: memref<1x64xf32, #tpu.memory_space<vmem>>, %arg6: memref<2x1xf32, #tpu.memory_space<vmem>>, %arg7: memref<2x64xf32, #tpu.memory_space<vmem>>) attributes {dimension_semantics = [#tpu.dimension_semantics<arbitrary>], iteration_bounds = array<i64: 1>, scalar_prefetch = 0 : i64, scratch_operands = 0 : i64, tpu.core_type = #tpu.core_type<tc>, window_params = [{transform_indices = @transform_0, window_bounds = array<i64: 384, 128>}, {pipeline_mode = #tpu.pipeline_mode<synchronous>, transform_indices = @transform_1, window_bounds = array<i64: 2, 128>}, {pipeline_mode = #tpu.pipeline_mode<synchronous>, transform_indices = @transform_2, window_bounds = array<i64: 2, 1>}, {pipeline_mode = #tpu.pipeline_mode<synchronous>, transform_indices = @transform_3, window_bounds = array<i64: 128, 64>}, {pipeline_mode = #tpu.pipeline_mode<synchronous>, transform_indices = @transform_4, window_bounds = array<i64: 1, 64>}, {pipeline_mode = #tpu.pipeline_mode<synchronous>, transform_indices = @transform_5, window_bounds = array<i64: 2, 1>}, {pipeline_mode = #tpu.pipeline_mode<synchronous>, transform_indices = @transform_6, window_bounds = array<i64: 2, 64>}]} {
    %c0 = arith.constant 0 : index
    %c0_0 = arith.constant 0 : index
    %0 = vector.load %arg1[%c0, %c0_0] : memref<384x128xbf16, #tpu.memory_space<vmem>>, vector<384x128xbf16>
    %c0_1 = arith.constant 0 : index
    %c0_2 = arith.constant 0 : index
    %1 = vector.load %arg2[%c0_1, %c0_2] : memref<2x128xbf16, #tpu.memory_space<vmem>>, vector<2x128xbf16>
    %cst = arith.constant dense<0.000000e+00> : vector<2x384xf32>
    %2 = tpu.matmul %1, %0, %cst {dimension_numbers = #tpu.dot_dimension_numbers<[1], [1], [0], [0], [0, 0, 1, 0], [], []>} : vector<2x128xbf16>, vector<384x128xbf16>, vector<2x384xf32> -> vector<2x384xf32>
    %c0_3 = arith.constant 0 : index
    %c0_4 = arith.constant 0 : index
    %3 = vector.load %arg3[%c0_3, %c0_4] : memref<2x1xf32, #tpu.memory_space<vmem>>, vector<2x1xf32>
    %4 = vector.broadcast %3 : vector<2x1xf32> to vector<2x384xf32>
    %5 = arith.addf %2, %4 : vector<2x384xf32>
    %6 = tpu.iota {dimensions = array<i32: 1>} : vector<2x384xi32>
    %c384_i32 = arith.constant 384 : i32
    %7 = arith.muli %arg0, %c384_i32 : i32
    %8 = vector.broadcast %7 : i32 to vector<2x384xi32>
    %9 = arith.addi %6, %8 : vector<2x384xi32>
    %c300_i32 = arith.constant 300 : i32
    %10 = vector.broadcast %c300_i32 : i32 to vector<2x384xi32>
    %11 = arith.cmpi slt, %9, %10 : vector<2x384xi32>
    %cst_5 = arith.constant -1.000000e+30 : f32
    %12 = vector.broadcast %cst_5 : f32 to vector<2x384xf32>
    %13 = arith.select %11, %5, %12 : vector<2x384xi1>, vector<2x384xf32>
    %c0_6 = arith.constant 0 : index
    %c0_7 = arith.constant 0 : index
    %14 = vector.load %arg4[%c0_6, %c0_7] : memref<128x64xbf16, #tpu.memory_space<vmem>>, vector<128x64xbf16>
    %cst_8 = arith.constant dense<0.000000e+00> : vector<384x64xf32>
    %15 = tpu.matmul %0, %14, %cst_8 {dimension_numbers = #tpu.dot_dimension_numbers<[1], [0], [0], [1], [0, 0, 1, 1], [], []>} : vector<384x128xbf16>, vector<128x64xbf16>, vector<384x64xf32> -> vector<384x64xf32>
    %c0_9 = arith.constant 0 : index
    %c0_10 = arith.constant 0 : index
    %16 = vector.load %arg5[%c0_9, %c0_10] : memref<1x64xf32, #tpu.memory_space<vmem>>, vector<1x64xf32>
    %17 = vector.broadcast %16 : vector<1x64xf32> to vector<384x64xf32>
    %18 = arith.addf %15, %17 : vector<384x64xf32>
    %cst_11 = arith.constant dense<0xFF800000> : vector<2xf32>
    %19 = vector.multi_reduction <maximumf>, %13, %cst_11 [1] : vector<2x384xf32> to vector<2xf32>
    %20 = vector.shape_cast %19 : vector<2xf32> to vector<2x1xf32>
    %21 = vector.broadcast %20 : vector<2x1xf32> to vector<2x384xf32>
    %22 = arith.cmpf oeq, %13, %21 : vector<2x384xf32>
    %c1073741824_i32 = arith.constant 1073741824 : i32
    %23 = vector.broadcast %c1073741824_i32 : i32 to vector<2x384xi32>
    %24 = arith.select %22, %9, %23 : vector<2x384xi1>, vector<2x384xi32>
    %cst_12 = arith.constant dense<2147483647> : vector<2xi32>
    %25 = vector.multi_reduction <minsi>, %24, %cst_12 [1] : vector<2x384xi32> to vector<2xi32>
    %26 = vector.shape_cast %25 : vector<2xi32> to vector<2x1xi32>
    %27 = vector.broadcast %26 : vector<2x1xi32> to vector<2x384xi32>
    %28 = arith.cmpi eq, %9, %27 : vector<2x384xi32>
    %29 = arith.extui %28 : vector<2x384xi1> to vector<2x384xi32>
    %30 = arith.sitofp %29 : vector<2x384xi32> to vector<2x384xf32>
    %cst_13 = arith.constant dense<0.000000e+00> : vector<2x64xf32>
    %31 = tpu.matmul %30, %18, %cst_13 {dimension_numbers = #tpu.dot_dimension_numbers<[1], [0], [0], [1], [0, 0, 1, 1], [], []>} : vector<2x384xf32>, vector<384x64xf32>, vector<2x64xf32> -> vector<2x64xf32>
    %c0_i32 = arith.constant 0 : i32
    %32 = arith.cmpi eq, %arg0, %c0_i32 : i32
    %33 = arith.extui %32 : i1 to i32
    %c0_i32_14 = arith.constant 0 : i32
    %34 = arith.cmpi ne, %33, %c0_i32_14 : i32
    scf.if %34 {
      %cst_25 = arith.constant -1.000000e+30 : f32
      %45 = vector.broadcast %cst_25 : f32 to vector<2x1xf32>
      %c0_26 = arith.constant 0 : index
      %c0_27 = arith.constant 0 : index
      %46 = vector.load %arg6[%c0_26, %c0_27] : memref<2x1xf32, #tpu.memory_space<vmem>>, vector<2x1xf32>
      tpu.vector_store %arg6[%c0_26, %c0_27], %45 {strides = array<i32>} : memref<2x1xf32, #tpu.memory_space<vmem>>, vector<2x1xf32>,
      %cst_28 = arith.constant 0.000000e+00 : f32
      %47 = vector.broadcast %cst_28 : f32 to vector<2x64xf32>
      %c0_29 = arith.constant 0 : index
      %c0_30 = arith.constant 0 : index
      %48 = vector.load %arg7[%c0_29, %c0_30] : memref<2x64xf32, #tpu.memory_space<vmem>>, vector<2x64xf32>
      tpu.vector_store %arg7[%c0_29, %c0_30], %47 {strides = array<i32>} : memref<2x64xf32, #tpu.memory_space<vmem>>, vector<2x64xf32>,
    } else {
    }
    %c0_15 = arith.constant 0 : index
    %c0_16 = arith.constant 0 : index
    %35 = vector.load %arg6[%c0_15, %c0_16] : memref<2x1xf32, #tpu.memory_space<vmem>>, vector<2x1xf32>
    %36 = arith.cmpf ogt, %20, %35 : vector<2x1xf32>
    %c0_17 = arith.constant 0 : index
    %c0_18 = arith.constant 0 : index
    %37 = vector.load %arg6[%c0_17, %c0_18] : memref<2x1xf32, #tpu.memory_space<vmem>>, vector<2x1xf32>
    %38 = arith.select %36, %20, %37 : vector<2x1xi1>, vector<2x1xf32>
    %c0_19 = arith.constant 0 : index
    %c0_20 = arith.constant 0 : index
    %39 = vector.load %arg6[%c0_19, %c0_20] : memref<2x1xf32, #tpu.memory_space<vmem>>, vector<2x1xf32>
    tpu.vector_store %arg6[%c0_19, %c0_20], %38 {strides = array<i32>} : memref<2x1xf32, #tpu.memory_space<vmem>>, vector<2x1xf32>,
    %c0_21 = arith.constant 0 : index
    %c0_22 = arith.constant 0 : index
    %40 = vector.load %arg7[%c0_21, %c0_22] : memref<2x64xf32, #tpu.memory_space<vmem>>, vector<2x64xf32>
    %41 = vector.shape_cast %36 : vector<2x1xi1> to vector<2x1xi1>
    %42 = vector.broadcast %41 : vector<2x1xi1> to vector<2x64xi1>
    %43 = arith.select %42, %31, %40 : vector<2x64xi1>, vector<2x64xf32>
    %c0_23 = arith.constant 0 : index
    %c0_24 = arith.constant 0 : index
    %44 = vector.load %arg7[%c0_23, %c0_24] : memref<2x64xf32, #tpu.memory_space<vmem>>, vector<2x64xf32>
    tpu.vector_store %arg7[%c0_23, %c0_24], %43 {strides = array<i32>} : memref<2x64xf32, #tpu.memory_space<vmem>>, vector<2x64xf32>,
    return
  }
  func.func @transform_0(%arg0: i32) -> (i32, i32) {
    %c0_i32 = arith.constant 0 : i32
    %c0_i32_0 = arith.constant 0 : i32
    return %arg0, %c0_i32 : i32, i32
  }
  func.func @transform_1(%arg0: i32) -> (i32, i32) {
    %c0_i32 = arith.constant 0 : i32
    %c0_i32_0 = arith.constant 0 : i32
    %c0_i32_1 = arith.constant 0 : i32
    return %c0_i32, %c0_i32_0 : i32, i32
  }
  func.func @transform_2(%arg0: i32) -> (i32, i32) {
    %c0_i32 = arith.constant 0 : i32
    %c0_i32_0 = arith.constant 0 : i32
    %c0_i32_1 = arith.constant 0 : i32
    return %c0_i32, %c0_i32_0 : i32, i32
  }
  func.func @transform_3(%arg0: i32) -> (i32, i32) {
    %c0_i32 = arith.constant 0 : i32
    %c0_i32_0 = arith.constant 0 : i32
    %c0_i32_1 = arith.constant 0 : i32
    return %c0_i32, %c0_i32_0 : i32, i32
  }
  func.func @transform_4(%arg0: i32) -> (i32, i32) {
    %c0_i32 = arith.constant 0 : i32
    %c0_i32_0 = arith.constant 0 : i32
    %c0_i32_1 = arith.constant 0 : i32
    return %c0_i32, %c0_i32_0 : i32, i32
  }
  func.func @transform_5(%arg0: i32) -> (i32, i32) {
    %c0_i32 = arith.constant 0 : i32
    %c0_i32_0 = arith.constant 0 : i32
    %c0_i32_1 = arith.constant 0 : i32
    return %c0_i32, %c0_i32_0 : i32, i32
  }
  func.func @transform_6(%arg0: i32) -> (i32, i32) {
    %c0_i32 = arith.constant 0 : i32
    %c0_i32_0 = arith.constant 0 : i32
    %c0_i32_1 = arith.constant 0 : i32
    return %c0_i32, %c0_i32_0 : i32, i32
  }
}

module attributes {stable_mosaic.version = 11 : i64} {
  func.func @_attn_kernel(%arg0: i32, %arg1: memref<2x384xf32, #tpu.memory_space<vmem>>, %arg2: memref<2x1xf32, #tpu.memory_space<vmem>>, %arg3: memref<2x1xf32, #tpu.memory_space<vmem>>, %arg4: memref<2x384xf32, #tpu.memory_space<vmem>>) attributes {dimension_semantics = [#tpu.dimension_semantics<parallel>], iteration_bounds = array<i64: 1>, scalar_prefetch = 0 : i64, scratch_operands = 0 : i64, tpu.core_type = #tpu.core_type<tc>, window_params = [{transform_indices = @transform_0, window_bounds = array<i64: 2, 384>}, {pipeline_mode = #tpu.pipeline_mode<synchronous>, transform_indices = @transform_1, window_bounds = array<i64: 2, 1>}, {pipeline_mode = #tpu.pipeline_mode<synchronous>, transform_indices = @transform_2, window_bounds = array<i64: 2, 1>}, {transform_indices = @transform_3, window_bounds = array<i64: 2, 384>}]} {
    %c0 = arith.constant 0 : index
    %c0_0 = arith.constant 0 : index
    %0 = vector.load %arg1[%c0, %c0_0] : memref<2x384xf32, #tpu.memory_space<vmem>>, vector<2x384xf32>
    %c0_1 = arith.constant 0 : index
    %c0_2 = arith.constant 0 : index
    %1 = vector.load %arg2[%c0_1, %c0_2] : memref<2x1xf32, #tpu.memory_space<vmem>>, vector<2x1xf32>
    %2 = vector.broadcast %1 : vector<2x1xf32> to vector<2x384xf32>
    %3 = arith.subf %0, %2 : vector<2x384xf32>
    %4 = math.exp %3 : vector<2x384xf32>
    %c0_3 = arith.constant 0 : index
    %c0_4 = arith.constant 0 : index
    %5 = vector.load %arg3[%c0_3, %c0_4] : memref<2x1xf32, #tpu.memory_space<vmem>>, vector<2x1xf32>
    %cst = arith.constant 1.000000e+00 : f32
    %6 = vector.broadcast %cst : f32 to vector<2x1xf32>
    %7 = arith.divf %6, %5 : vector<2x1xf32>
    %8 = vector.broadcast %7 : vector<2x1xf32> to vector<2x384xf32>
    %9 = arith.mulf %4, %8 : vector<2x384xf32>
    %c0_5 = arith.constant 0 : index
    %c0_6 = arith.constant 0 : index
    %10 = vector.load %arg4[%c0_5, %c0_6] : memref<2x384xf32, #tpu.memory_space<vmem>>, vector<2x384xf32>
    tpu.vector_store %arg4[%c0_5, %c0_6], %9 {strides = array<i32>} : memref<2x384xf32, #tpu.memory_space<vmem>>, vector<2x384xf32>,
    return
  }
  func.func @transform_0(%arg0: i32) -> (i32, i32) {
    %c0_i32 = arith.constant 0 : i32
    %c0_i32_0 = arith.constant 0 : i32
    return %c0_i32, %arg0 : i32, i32
  }
  func.func @transform_1(%arg0: i32) -> (i32, i32) {
    %c0_i32 = arith.constant 0 : i32
    %c0_i32_0 = arith.constant 0 : i32
    %c0_i32_1 = arith.constant 0 : i32
    return %c0_i32, %c0_i32_0 : i32, i32
  }
  func.func @transform_2(%arg0: i32) -> (i32, i32) {
    %c0_i32 = arith.constant 0 : i32
    %c0_i32_0 = arith.constant 0 : i32
    %c0_i32_1 = arith.constant 0 : i32
    return %c0_i32, %c0_i32_0 : i32, i32
  }
  func.func @transform_3(%arg0: i32) -> (i32, i32) {
    %c0_i32 = arith.constant 0 : i32
    %c0_i32_0 = arith.constant 0 : i32
    return %c0_i32, %arg0 : i32, i32
  }
}

</mosaic_0001>

<llo_original>
// kernel: dsmil_forward.5
$region0: #{dsmil_forward.5}
  #allocation0 [shape = 'u32[]', space=smem, size = 0x4, offset = 0x4, fixed_abs, tag = 'smem constant byte address 0x4 - core index']
  #allocation1 [shape = 'u32[144,128]{1,0:T(1,128)}', space=vmem, size = 0x12000, scoped, tag = 'internal scratch']
  %s0 = inlined_call_operand.vmem [shape: f32[2,384], index: 0, kind: input, shape index: {}]
  %s1 = inlined_call_operand.vmem [shape: f32[2,1], index: 1, kind: input, shape index: {}]
  %s2 = inlined_call_operand.vmem [shape: f32[2,1], index: 2, kind: input, shape index: {}]
  %s3 = inlined_call_operand.vmem [shape: f32[2,384], index: 3, kind: output, shape index: {}]
  %s4 = sld [smem:[#allocation0]]
  $region22: #{dsmil_forward.5} parent=0
    _
  %s6 = ssub.s32 1, %s4
  %s7 = scalar_select 0, %s6, %s4
  // Predicated region
  $region2: #{dsmil_forward.5} parent=0 // pred_check
    _
  $region3: #{dsmil_forward.5} parent=0 // pred_check_branch
    %9 = sbr.rel (0) target = $region5
  $region4: #{dsmil_forward.5} parent=0 // pred_region
    _
  $region5: #{dsmil_forward.5} parent=0 // pred_fallthru
    _
  // Predicated region
  $region6: #{dsmil_forward.5} parent=0 // pred_check
    _
  $region7: #{dsmil_forward.5} parent=0 // pred_check_branch
    %11 = sbr.rel (0) target = $region9
  $region8: #{dsmil_forward.5} parent=0 // pred_region
    _
  $region9: #{dsmil_forward.5} parent=0 // pred_fallthru
    _
  // Predicated region
  $region10: #{dsmil_forward.5} parent=0 // pred_check
    _
  $region11: #{dsmil_forward.5} parent=0 // pred_check_branch
    %13 = sbr.rel (0) target = $region13
  $region12: #{dsmil_forward.5} parent=0 // pred_region
    _
  $region13: #{dsmil_forward.5} parent=0 // pred_fallthru
    _
  %v14 = vld [vmem:[%s0] sm:$0x3f]
  %v15 = vld [vmem:[%s1] sm:$0x3]
  %17 = vset.pattern.permute.xlu0 0
  %18 = vperm.xlu0 %17, %v15
  %v19 = vpop.permute.xlu0 %18
  %v21 = vunpack.c.l.s4 269488144
  %v22 = vunpack.c.0.s8 %v21
  %v23 = vlaneseq
  %v24 = vshrl.u32 %v23, 7
  %v25 = vsub.s32 %v22, %v24
  %v26 = vrot.slane %v19, %v25
  %v28 = vsub.f32 %v14, %v26
  %v29 = vmul.f32 %v28, 1.442695
  %v30 = vpow.pop %v29
  %v31 = vld [vmem:[%s2] sm:$0x3]
  %v32 = vrcp.pop %v31
  %v33 = vmul.f32 1.0, %v32
  %35 = vset.pattern.permute.xlu0 0
  %36 = vperm.xlu0 %35, %v33
  %v37 = vpop.permute.xlu0 %36
  %v39 = vunpack.c.l.s4 269488144
  %v40 = vunpack.c.0.s8 %v39
  %v41 = vlaneseq
  %v42 = vshrl.u32 %v41, 7
  %v43 = vsub.s32 %v40, %v42
  %v44 = vrot.slane %v37, %v43
  %v46 = vmul.f32 %v30, %v44
  %47 = vst [vmem:[%s3] sm:$0x3f] %v46
  // Predicated region
  $region14: #{dsmil_forward.5} parent=0 // pred_check
    _
  $region15: #{dsmil_forward.5} parent=0 // pred_check_branch
    %49 = sbr.rel (0) target = $region17
  $region16: #{dsmil_forward.5} parent=0 // pred_region
    _
  $region17: #{dsmil_forward.5} parent=0 // pred_fallthru
    _
  // Predicated region
  $region18: #{dsmil_forward.5} parent=0 // pred_check
    _
  $region19: #{dsmil_forward.5} parent=0 // pred_check_branch
    %51 = sbr.rel (0) target = $region21
  $region20: #{dsmil_forward.5} parent=0 // pred_region
    _
  $region21: #{dsmil_forward.5} parent=0 // pred_fallthru
    _

// kernel: dsmil_forward.3
$region0: #{dsmil_forward.3}
  #allocation0 [shape = 'u32[]', space=smem, size = 0x4, offset = 0x4, fixed_abs, tag = 'smem constant byte address 0x4 - core index']
  #allocation1 [shape = 'u32[144,128]{1,0:T(1,128)}', space=vmem, size = 0x12000, scoped, tag = 'internal scratch']
  %s0 = inlined_call_operand.vmem [shape: bf16[384,128], index: 0, kind: input, shape index: {}]
  %s1 = inlined_call_operand.vmem [shape: bf16[2,128], index: 1, kind: input, shape index: {}]
  %s2 = inlined_call_operand.vmem [shape: f32[2,1], index: 2, kind: input, shape index: {}]
  %s3 = inlined_call_operand.vmem [shape: bf16[128,64], index: 3, kind: input, shape index: {}]
  %s4 = inlined_call_operand.vmem [shape: f32[1,64], index: 4, kind: input, shape index: {}]
  %s5 = inlined_call_operand.vmem [shape: f32[2,1], index: 5, kind: output, shape index: {0}]
  %s6 = inlined_call_operand.vmem [shape: f32[2,64], index: 6, kind: output, shape index: {1}]
  %7 = xla_tuple %s5, %s6
  %s8 = sld [smem:[#allocation0]]
  $region42: #{dsmil_forward.3} parent=0
    _
  %s10 = ssub.s32 1, %s8
  %s11 = scalar_select 0, %s10, %s8
  // Predicated region
  $region2: #{dsmil_forward.3} parent=0 // pred_check
    _
  $region3: #{dsmil_forward.3} parent=0 // pred_check_branch
    %13 = sbr.rel (0) target = $region5
  $region4: #{dsmil_forward.3} parent=0 // pred_region
    _
  $region5: #{dsmil_forward.3} parent=0 // pred_fallthru
    _
  // Predicated region
  $region6: #{dsmil_forward.3} parent=0 // pred_check
    _
  $region7: #{dsmil_forward.3} parent=0 // pred_check_branch
    %15 = sbr.rel (0) target = $region9
  $region8: #{dsmil_forward.3} parent=0 // pred_region
    _
  $region9: #{dsmil_forward.3} parent=0 // pred_fallthru
    _
  // Predicated region
  $region10: #{dsmil_forward.3} parent=0 // pred_check
    _
  $region11: #{dsmil_forward.3} parent=0 // pred_check_branch
    %17 = sbr.rel (0) target = $region13
  $region12: #{dsmil_forward.3} parent=0 // pred_region
    _
  $region13: #{dsmil_forward.3} parent=0 // pred_fallthru
    _
  // Predicated region
  $region14: #{dsmil_forward.3} parent=0 // pred_check
    _
  $region15: #{dsmil_forward.3} parent=0 // pred_check_branch
    %19 = sbr.rel (0) target = $region17
  $region16: #{dsmil_forward.3} parent=0 // pred_region
    _
  $region17: #{dsmil_forward.3} parent=0 // pred_fallthru
    _
  // Predicated region
  $region18: #{dsmil_forward.3} parent=0 // pred_check
    _
  $region19: #{dsmil_forward.3} parent=0 // pred_check_branch
    %21 = sbr.rel (0) target = $region21
  $region20: #{dsmil_forward.3} parent=0 // pred_region
    _
  $region21: #{dsmil_forward.3} parent=0 // pred_fallthru
    _
  %v23 = vld [vmem:[%s0] sm:$0xf]
  %v24 = vld [vmem:[%s0 + $0x4] sm:$0xf]
  %v25 = vld [vmem:[%s0 + $0x8] sm:$0xf]
  %v26 = vld [vmem:[%s0 + $0xc] sm:$0xf]
  %v27 = vld [vmem:[%s0 + $0x10] sm:$0xf]
  %v28 = vld [vmem:[%s0 + $0x14] sm:$0xf]
  %v29 = vld [vmem:[%s0 + $0x18] sm:$0xf]
  %v30 = vld [vmem:[%s0 + $0x1c] sm:$0xf]
  %v31 = vld [vmem:[%s0 + $0x20] sm:$0xf]
  %v32 = vld [vmem:[%s0 + $0x24] sm:$0xf]
  %v33 = vld [vmem:[%s0 + $0x28] sm:$0xf]
  %v34 = vld [vmem:[%s0 + $0x2c] sm:$0xf]
  %v35 = vld [vmem:[%s0 + $0x30] sm:$0xf]
  %v36 = vld [vmem:[%s0 + $0x34] sm:$0xf]
  %v37 = vld [vmem:[%s0 + $0x38] sm:$0xf]
  %v38 = vld [vmem:[%s0 + $0x3c] sm:$0xf]
  %v39 = vld [vmem:[%s0 + $0x40] sm:$0xf]
  %v40 = vld [vmem:[%s0 + $0x44] sm:$0xf]
  %v41 = vld [vmem:[%s0 + $0x48] sm:$0xf]
  %v42 = vld [vmem:[%s0 + $0x4c] sm:$0xf]
  %v43 = vld [vmem:[%s0 + $0x50] sm:$0xf]
  %v44 = vld [vmem:[%s0 + $0x54] sm:$0xf]
  %v45 = vld [vmem:[%s0 + $0x58] sm:$0xf]
  %v46 = vld [vmem:[%s0 + $0x5c] sm:$0xf]
  %v47 = vld [vmem:[%s0 + $0x60] sm:$0xf]
  %v48 = vld [vmem:[%s0 + $0x64] sm:$0xf]
  %v49 = vld [vmem:[%s0 + $0x68] sm:$0xf]
  %v50 = vld [vmem:[%s0 + $0x6c] sm:$0xf]
  %v51 = vld [vmem:[%s0 + $0x70] sm:$0xf]
  %v52 = vld [vmem:[%s0 + $0x74] sm:$0xf]
  %v53 = vld [vmem:[%s0 + $0x78] sm:$0xf]
  %v54 = vld [vmem:[%s0 + $0x7c] sm:$0xf]
  %v55 = vld [vmem:[%s0 + $0x80] sm:$0xf]
  %v56 = vld [vmem:[%s0 + $0x84] sm:$0xf]
  %v57 = vld [vmem:[%s0 + $0x88] sm:$0xf]
  %v58 = vld [vmem:[%s0 + $0x8c] sm:$0xf]
  %v59 = vld [vmem:[%s0 + $0x90] sm:$0xf]
  %v60 = vld [vmem:[%s0 + $0x94] sm:$0xf]
  %v61 = vld [vmem:[%s0 + $0x98] sm:$0xf]
  %v62 = vld [vmem:[%s0 + $0x9c] sm:$0xf]
  %v63 = vld [vmem:[%s0 + $0xa0] sm:$0xf]
  %v64 = vld [vmem:[%s0 + $0xa4] sm:$0xf]
  %v65 = vld [vmem:[%s0 + $0xa8] sm:$0xf]
  %v66 = vld [vmem:[%s0 + $0xac] sm:$0xf]
  %v67 = vld [vmem:[%s0 + $0xb0] sm:$0xf]
  %v68 = vld [vmem:[%s0 + $0xb4] sm:$0xf]
  %v69 = vld [vmem:[%s0 + $0xb8] sm:$0xf]
  %v70 = vld [vmem:[%s0 + $0xbc] sm:$0xf]
  %v71 = vld [vmem:[%s1] sm:$0x1]
  %v72 = vld [vmem:[%s2] sm:$0x3]
  %74 = vset.pattern.permute.xlu0 0
  %75 = vperm.xlu0 %74, %v72
  %v76 = vpop.permute.xlu0 %75
  %v126 = vunpack.c.l.b16 %v23
  %v127 = vunpack.c.l.b16 %v24
  %v128 = vunpack.c.l.b16 %v25
  %v129 = vunpack.c.l.b16 %v26
  %v130 = vunpack.c.l.b16 %v27
  %v131 = vunpack.c.l.b16 %v28
  %v132 = vunpack.c.l.b16 %v29
  %v133 = vunpack.c.l.b16 %v30
  %v134 = vunpack.c.l.b16 %v31
  %v135 = vunpack.c.l.b16 %v32
  %v136 = vunpack.c.l.b16 %v33
  %v137 = vunpack.c.l.b16 %v34
  %v138 = vunpack.c.l.b16 %v35
  %v139 = vunpack.c.l.b16 %v36
  %v140 = vunpack.c.l.b16 %v37
  %v141 = vunpack.c.l.b16 %v38
  %v142 = vunpack.c.l.b16 %v39
  %v143 = vunpack.c.l.b16 %v40
  %v144 = vunpack.c.l.b16 %v41
  %v145 = vunpack.c.l.b16 %v42
  %v146 = vunpack.c.l.b16 %v43
  %v147 = vunpack.c.l.b16 %v44
  %v148 = vunpack.c.l.b16 %v45
  %v149 = vunpack.c.l.b16 %v46
  %v150 = vunpack.c.l.b16 %v47
  %v151 = vunpack.c.l.b16 %v48
  %v152 = vunpack.c.l.b16 %v49
  %v153 = vunpack.c.l.b16 %v50
  %v154 = vunpack.c.l.b16 %v51
  %v155 = vunpack.c.l.b16 %v52
  %v156 = vunpack.c.l.b16 %v53
  %v157 = vunpack.c.l.b16 %v54
  %v158 = vunpack.c.l.b16 %v55
  %v159 = vunpack.c.l.b16 %v56
  %v160 = vunpack.c.l.b16 %v57
  %v161 = vunpack.c.l.b16 %v58
  %v162 = vunpack.c.l.b16 %v59
  %v163 = vunpack.c.l.b16 %v60
  %v164 = vunpack.c.l.b16 %v61
  %v165 = vunpack.c.l.b16 %v62
  %v166 = vunpack.c.l.b16 %v63
  %v167 = vunpack.c.l.b16 %v64
  %v168 = vunpack.c.l.b16 %v65
  %v169 = vunpack.c.l.b16 %v66
  %v170 = vunpack.c.l.b16 %v67
  %v171 = vunpack.c.l.b16 %v68
  %v172 = vunpack.c.l.b16 %v69
  %v173 = vunpack.c.l.b16 %v70
  %v174 = vpack.c.b16 %v127, %v126
  %v175 = vpack.c.b16 %v129, %v128
  %v176 = vpack.c.b16 %v131, %v130
  %v177 = vpack.c.b16 %v133, %v132
  %v178 = vpack.c.b16 %v135, %v134
  %v179 = vpack.c.b16 %v137, %v136
  %v180 = vpack.c.b16 %v139, %v138
  %v181 = vpack.c.b16 %v141, %v140
  %v182 = vpack.c.b16 %v143, %v142
  %v183 = vpack.c.b16 %v145, %v144
  %v184 = vpack.c.b16 %v147, %v146
  %v185 = vpack.c.b16 %v149, %v148
  %v186 = vpack.c.b16 %v151, %v150
  %v187 = vpack.c.b16 %v153, %v152
  %v188 = vpack.c.b16 %v155, %v154
  %v189 = vpack.c.b16 %v157, %v156
  %v190 = vpack.c.b16 %v159, %v158
  %v191 = vpack.c.b16 %v161, %v160
  %v192 = vpack.c.b16 %v163, %v162
  %v193 = vpack.c.b16 %v165, %v164
  %v194 = vpack.c.b16 %v167, %v166
  %v195 = vpack.c.b16 %v169, %v168
  %v196 = vpack.c.b16 %v171, %v170
  %v197 = vpack.c.b16 %v173, %v172
  %222 = vmatprep.subr.bf16.mxu0 0
  %223 = vmatpush1.bf16.xpose.msra.mxu0 %v181
  %224 = vmatprep.subr.bf16.mxu0 0
  %225 = vmatpush1.bf16.xpose.msra.mxu0 %v180
  %226 = vmatprep.subr.bf16.mxu0 0
  %227 = vmatpush1.bf16.xpose.msra.mxu0 %v179
  %228 = vmatprep.subr.bf16.mxu0 0
  %229 = vmatpush1.bf16.xpose.msra.mxu0 %v178
  %230 = vmatprep.subr.bf16.mxu0 0
  %231 = vmatpush1.bf16.xpose.msra.mxu0 %v177
  %232 = vmatprep.subr.bf16.mxu0 0
  %233 = vmatpush1.bf16.xpose.msra.mxu0 %v176
  %234 = vmatprep.subr.bf16.mxu0 0
  %235 = vmatpush1.bf16.xpose.msra.mxu0 %v175
  %236 = vmatprep.subr.bf16.mxu0 0
  %237 = vmatpush1.bf16.xpose.msra.mxu0 %v174
  %238 = vmatprep.subr.bf16.mxu0 0
  %239 = vmatpush2.bf16.xpose.msra.mxu0 %v189
  %240 = vmatprep.subr.bf16.mxu0 0
  %241 = vmatpush2.bf16.xpose.msra.mxu0 %v188
  %242 = vmatprep.subr.bf16.mxu0 0
  %243 = vmatpush2.bf16.xpose.msra.mxu0 %v187
  %244 = vmatprep.subr.bf16.mxu0 0
  %245 = vmatpush2.bf16.xpose.msra.mxu0 %v186
  %246 = vmatprep.subr.bf16.mxu0 0
  %247 = vmatpush2.bf16.xpose.msra.mxu0 %v185
  %248 = vmatprep.subr.bf16.mxu0 0
  %249 = vmatpush2.bf16.xpose.msra.mxu0 %v184
  %250 = vmatprep.subr.bf16.mxu0 0
  %251 = vmatpush2.bf16.xpose.msra.mxu0 %v183
  %252 = vmatprep.subr.bf16.mxu0 0
  %253 = vmatpush2.bf16.xpose.msra.mxu0 %v182
  %254 = vmatprep.mubr.bf16.mxu0 0
  %255 = vmatmul.mubr.bf16.gmra.mxu0 %v71
  %v256 = vpop.f32.mrf.mxu0
  %v257 = vadd.f32 %v76, %v256
  %v258 = vpop.f32.mrf.mxu0
  %v259 = vadd.f32 %v76, %v258
  %v260 = vpop.f32.mrf.mxu0
  %v261 = vpop.f32.mrf.mxu0
  %262 = vdwg.mxu0
  %263 = vmatprep.subr.bf16.mxu0 0
  %264 = vmatpush1.bf16.xpose.msra.mxu0 %v197
  %265 = vmatprep.subr.bf16.mxu0 0
  %266 = vmatpush1.bf16.xpose.msra.mxu0 %v196
  %267 = vmatprep.subr.bf16.mxu0 0
  %268 = vmatpush1.bf16.xpose.msra.mxu0 %v195
  %269 = vmatprep.subr.bf16.mxu0 0
  %270 = vmatpush1.bf16.xpose.msra.mxu0 %v194
  %271 = vmatprep.subr.bf16.mxu0 0
  %272 = vmatpush1.bf16.xpose.msra.mxu0 %v193
  %273 = vmatprep.subr.bf16.mxu0 0
  %274 = vmatpush1.bf16.xpose.msra.mxu0 %v192
  %275 = vmatprep.subr.bf16.mxu0 0
  %276 = vmatpush1.bf16.xpose.msra.mxu0 %v191
  %277 = vmatprep.subr.bf16.mxu0 0
  %278 = vmatpush1.bf16.xpose.msra.mxu0 %v190
  %279 = vmatprep.subr.bf16.mxu0 0
  %280 = vmatpush2.bf16.xpose.msra.mxu0 0
  %281 = vmatprep.subr.bf16.mxu0 0
  %282 = vmatpush2.bf16.xpose.msra.mxu0 0
  %283 = vmatprep.subr.bf16.mxu0 0
  %284 = vmatpush2.bf16.xpose.msra.mxu0 0
  %285 = vmatprep.subr.bf16.mxu0 0
  %286 = vmatpush2.bf16.xpose.msra.mxu0 0
  %287 = vmatprep.subr.bf16.mxu0 0
  %288 = vmatpush2.bf16.xpose.msra.mxu0 0
  %289 = vmatprep.subr.bf16.mxu0 0
  %290 = vmatpush2.bf16.xpose.msra.mxu0 0
  %291 = vmatprep.subr.bf16.mxu0 0
  %292 = vmatpush2.bf16.xpose.msra.mxu0 0
  %293 = vmatprep.subr.bf16.mxu0 0
  %294 = vmatpush2.bf16.xpose.msra.mxu0 0
  %295 = vmatprep.mubr.bf16.mxu0 0
  %296 = vmatmul.mubr.bf16.gmra.mxu0 %v71
  %v297 = vpop.f32.mrf.mxu0
  %v298 = vadd.f32 %v76, %v297
  %v299 = vpop.f32.mrf.mxu0
  %v300 = vpop.f32.mrf.mxu0
  %v301 = vpop.f32.mrf.mxu0
  %302 = vdwg.mxu0
  %v303 = vlaneseq
  %v304 = vand.u32 %v303, 127
  %v305 = vadd.s32 %v304, 128
  %v306 = vadd.s32 %v304, 256
  %s307 = smul.u32 0, 384
  %v308 = vstv %s307
  %v309 = vadd.s32 %v304, %v308
  %v310 = vadd.s32 %v305, %v308
  %v311 = vadd.s32 %v306, %v308
  %vm312 = vcmp.lt.s32.totalorder %v309, 300
  %vm313 = vcmp.lt.s32.totalorder %v310, 300
  %vm314 = vcmp.lt.s32.totalorder %v311, 300
  %v315 = vsel %vm312, %v257, -1e+30
  %v316 = vsel %vm313, %v259, -1e+30
  %v317 = vsel %vm314, %v298, -1e+30
  %v318 = vld [vmem:[%s3] sm:$0xf]
  %v319 = vld [vmem:[%s3 + $0x4] sm:$0xf]
  %v320 = vld [vmem:[%s3 + $0x8] sm:$0xf]
  %v321 = vld [vmem:[%s3 + $0xc] sm:$0xf]
  %v322 = vld [vmem:[%s3 + $0x10] sm:$0xf]
  %v323 = vld [vmem:[%s3 + $0x14] sm:$0xf]
  %v324 = vld [vmem:[%s3 + $0x18] sm:$0xf]
  %v325 = vld [vmem:[%s3 + $0x1c] sm:$0xf]
  %v326 = vld [vmem:[%s3 + $0x20] sm:$0xf]
  %v327 = vld [vmem:[%s3 + $0x24] sm:$0xf]
  %v328 = vld [vmem:[%s3 + $0x28] sm:$0xf]
  %v329 = vld [vmem:[%s3 + $0x2c] sm:$0xf]
  %v330 = vld [vmem:[%s3 + $0x30] sm:$0xf]
  %v331 = vld [vmem:[%s3 + $0x34] sm:$0xf]
  %v332 = vld [vmem:[%s3 + $0x38] sm:$0xf]
  %v333 = vld [vmem:[%s3 + $0x3c] sm:$0xf]
  %v334 = vld [vmem:[%s4] sm:$0x1]
  %v336 = vlaneseq
  %v337 = vshrl.u32 %v336, 7
  %v338 = vsub.s32 0, %v337
  %v339 = vrot.slane %v334, %v338
  %v357 = vunpack.c.l.b16 %v318
  %v358 = vunpack.c.l.b16 %v319
  %v359 = vunpack.c.l.b16 %v320
  %v360 = vunpack.c.l.b16 %v321
  %v361 = vunpack.c.l.b16 %v322
  %v362 = vunpack.c.l.b16 %v323
  %v363 = vunpack.c.l.b16 %v324
  %v364 = vunpack.c.l.b16 %v325
  %v365 = vunpack.c.l.b16 %v326
  %v366 = vunpack.c.l.b16 %v327
  %v367 = vunpack.c.l.b16 %v328
  %v368 = vunpack.c.l.b16 %v329
  %v369 = vunpack.c.l.b16 %v330
  %v370 = vunpack.c.l.b16 %v331
  %v371 = vunpack.c.l.b16 %v332
  %v372 = vunpack.c.l.b16 %v333
  %v373 = vpack.c.b16 %v358, %v357
  %v374 = vpack.c.b16 %v360, %v359
  %v375 = vpack.c.b16 %v362, %v361
  %v376 = vpack.c.b16 %v364, %v363
  %v377 = vpack.c.b16 %v366, %v365
  %v378 = vpack.c.b16 %v368, %v367
  %v379 = vpack.c.b16 %v370, %v369
  %v380 = vpack.c.b16 %v372, %v371
  %389 = vmatprep.subr.bf16.mxu0 0
  %390 = vmatpush1.bf16.msra.mxu0 %v380
  %391 = vmatprep.subr.bf16.mxu0 0
  %392 = vmatpush1.bf16.msra.mxu0 %v379
  %393 = vmatprep.subr.bf16.mxu0 0
  %394 = vmatpush1.bf16.msra.mxu0 %v378
  %395 = vmatprep.subr.bf16.mxu0 0
  %396 = vmatpush1.bf16.msra.mxu0 %v377
  %397 = vmatprep.subr.bf16.mxu0 0
  %398 = vmatpush1.bf16.msra.mxu0 %v376
  %399 = vmatprep.subr.bf16.mxu0 0
  %400 = vmatpush1.bf16.msra.mxu0 %v375
  %401 = vmatprep.subr.bf16.mxu0 0
  %402 = vmatpush1.bf16.msra.mxu0 %v374
  %403 = vmatprep.subr.bf16.mxu0 0
  %404 = vmatpush1.bf16.msra.mxu0 %v373
  %405 = vmatprep.subr.bf16.mxu0 0
  %406 = vmatpush2.bf16.msra.mxu0 0
  %407 = vmatprep.subr.bf16.mxu0 0
  %408 = vmatpush2.bf16.msra.mxu0 0
  %409 = vmatprep.subr.bf16.mxu0 0
  %410 = vmatpush2.bf16.msra.mxu0 0
  %411 = vmatprep.subr.bf16.mxu0 0
  %412 = vmatpush2.bf16.msra.mxu0 0
  %413 = vmatprep.subr.bf16.mxu0 0
  %414 = vmatpush2.bf16.msra.mxu0 0
  %415 = vmatprep.subr.bf16.mxu0 0
  %416 = vmatpush2.bf16.msra.mxu0 0
  %417 = vmatprep.subr.bf16.mxu0 0
  %418 = vmatpush2.bf16.msra.mxu0 0
  %419 = vmatprep.subr.bf16.mxu0 0
  %420 = vmatpush2.bf16.msra.mxu0 0
  %421 = vmatprep.mubr.bf16.mxu0 0
  %422 = vmatmul.mubr.bf16.gmra.mxu0 %v174
  %v423 = vpop.f32.mrf.mxu0
  %v424 = vadd.f32 %v339, %v423
  %v425 = vpop.f32.mrf.mxu0
  %v426 = vpop.f32.mrf.mxu0
  %v427 = vadd.f32 %v339, %v426
  %v428 = vpop.f32.mrf.mxu0
  %429 = vmatprep.mubr.bf16.mxu0 0
  %430 = vmatmul.mubr.bf16.gmra.mxu0 %v175
  %v431 = vpop.f32.mrf.mxu0
  %v432 = vadd.f32 %v339, %v431
  %v433 = vpop.f32.mrf.mxu0
  %v434 = vpop.f32.mrf.mxu0
  %v435 = vadd.f32 %v339, %v434
  %v436 = vpop.f32.mrf.mxu0
  %437 = vmatprep.mubr.bf16.mxu0 0
  %438 = vmatmul.mubr.bf16.gmra.mxu0 %v176
  %v439 = vpop.f32.mrf.mxu0
  %v440 = vadd.f32 %v339, %v439
  %v441 = vpop.f32.mrf.mxu0
  %v442 = vpop.f32.mrf.mxu0
  %v443 = vadd.f32 %v339, %v442
  %v444 = vpop.f32.mrf.mxu0
  %445 = vmatprep.mubr.bf16.mxu0 0
  %446 = vmatmul.mubr.bf16.gmra.mxu0 %v177
  %v447 = vpop.f32.mrf.mxu0
  %v448 = vadd.f32 %v339, %v447
  %v449 = vpop.f32.mrf.mxu0
  %v450 = vpop.f32.mrf.mxu0
  %v451 = vadd.f32 %v339, %v450
  %v452 = vpop.f32.mrf.mxu0
  %453 = vmatprep.mubr.bf16.mxu0 0
  %454 = vmatmul.mubr.bf16.gmra.mxu0 %v178
  %v455 = vpop.f32.mrf.mxu0
  %v456 = vadd.f32 %v339, %v455
  %v457 = vpop.f32.mrf.mxu0
  %v458 = vpop.f32.mrf.mxu0
  %v459 = vadd.f32 %v339, %v458
  %v460 = vpop.f32.mrf.mxu0
  %461 = vmatprep.mubr.bf16.mxu0 0
  %462 = vmatmul.mubr.bf16.gmra.mxu0 %v179
  %v463 = vpop.f32.mrf.mxu0
  %v464 = vadd.f32 %v339, %v463
  %v465 = vpop.f32.mrf.mxu0
  %v466 = vpop.f32.mrf.mxu0
  %v467 = vadd.f32 %v339, %v466
  %v468 = vpop.f32.mrf.mxu0
  %469 = vmatprep.mubr.bf16.mxu0 0
  %470 = vmatmul.mubr.bf16.gmra.mxu0 %v180
  %v471 = vpop.f32.mrf.mxu0
  %v472 = vadd.f32 %v339, %v471
  %v473 = vpop.f32.mrf.mxu0
  %v474 = vpop.f32.mrf.mxu0
  %v475 = vadd.f32 %v339, %v474
  %v476 = vpop.f32.mrf.mxu0
  %477 = vmatprep.mubr.bf16.mxu0 0
  %478 = vmatmul.mubr.bf16.gmra.mxu0 %v181
  %v479 = vpop.f32.mrf.mxu0
  %v480 = vadd.f32 %v339, %v479
  %v481 = vpop.f32.mrf.mxu0
  %v482 = vpop.f32.mrf.mxu0
  %v483 = vadd.f32 %v339, %v482
  %v484 = vpop.f32.mrf.mxu0
  %485 = vmatprep.mubr.bf16.mxu0 0
  %486 = vmatmul.mubr.bf16.gmra.mxu0 %v182
  %v487 = vpop.f32.mrf.mxu0
  %v488 = vadd.f32 %v339, %v487
  %v489 = vpop.f32.mrf.mxu0
  %v490 = vpop.f32.mrf.mxu0
  %v491 = vadd.f32 %v339, %v490
  %v492 = vpop.f32.mrf.mxu0
  %493 = vmatprep.mubr.bf16.mxu0 0
  %494 = vmatmul.mubr.bf16.gmra.mxu0 %v183
  %v495 = vpop.f32.mrf.mxu0
  %v496 = vadd.f32 %v339, %v495
  %v497 = vpop.f32.mrf.mxu0
  %v498 = vpop.f32.mrf.mxu0
  %v499 = vadd.f32 %v339, %v498
  %v500 = vpop.f32.mrf.mxu0
  %501 = vmatprep.mubr.bf16.mxu0 0
  %502 = vmatmul.mubr.bf16.gmra.mxu0 %v184
  %v503 = vpop.f32.mrf.mxu0
  %v504 = vadd.f32 %v339, %v503
  %v505 = vpop.f32.mrf.mxu0
  %v506 = vpop.f32.mrf.mxu0
  %v507 = vadd.f32 %v339, %v506
  %v508 = vpop.f32.mrf.mxu0
  %509 = vmatprep.mubr.bf16.mxu0 0
  %510 = vmatmul.mubr.bf16.gmra.mxu0 %v185
  %v511 = vpop.f32.mrf.mxu0
  %v512 = vadd.f32 %v339, %v511
  %v513 = vpop.f32.mrf.mxu0
  %v514 = vpop.f32.mrf.mxu0
  %v515 = vadd.f32 %v339, %v514
  %v516 = vpop.f32.mrf.mxu0
  %517 = vmatprep.mubr.bf16.mxu0 0
  %518 = vmatmul.mubr.bf16.gmra.mxu0 %v186
  %v519 = vpop.f32.mrf.mxu0
  %v520 = vadd.f32 %v339, %v519
  %v521 = vpop.f32.mrf.mxu0
  %v522 = vpop.f32.mrf.mxu0
  %v523 = vadd.f32 %v339, %v522
  %v524 = vpop.f32.mrf.mxu0
  %525 = vmatprep.mubr.bf16.mxu0 0
  %526 = vmatmul.mubr.bf16.gmra.mxu0 %v187
  %v527 = vpop.f32.mrf.mxu0
  %v528 = vadd.f32 %v339, %v527
  %v529 = vpop.f32.mrf.mxu0
  %v530 = vpop.f32.mrf.mxu0
  %v531 = vadd.f32 %v339, %v530
  %v532 = vpop.f32.mrf.mxu0
  %533 = vmatprep.mubr.bf16.mxu0 0
  %534 = vmatmul.mubr.bf16.gmra.mxu0 %v188
  %v535 = vpop.f32.mrf.mxu0
  %v536 = vadd.f32 %v339, %v535
  %v537 = vpop.f32.mrf.mxu0
  %v538 = vpop.f32.mrf.mxu0
  %v539 = vadd.f32 %v339, %v538
  %v540 = vpop.f32.mrf.mxu0
  %541 = vmatprep.mubr.bf16.mxu0 0
  %542 = vmatmul.mubr.bf16.gmra.mxu0 %v189
  %v543 = vpop.f32.mrf.mxu0
  %v544 = vadd.f32 %v339, %v543
  %v545 = vpop.f32.mrf.mxu0
  %v546 = vpop.f32.mrf.mxu0
  %v547 = vadd.f32 %v339, %v546
  %v548 = vpop.f32.mrf.mxu0
  %549 = vmatprep.mubr.bf16.mxu0 0
  %550 = vmatmul.mubr.bf16.gmra.mxu0 %v190
  %v551 = vpop.f32.mrf.mxu0
  %v552 = vadd.f32 %v339, %v551
  %v553 = vpop.f32.mrf.mxu0
  %v554 = vpop.f32.mrf.mxu0
  %v555 = vadd.f32 %v339, %v554
  %v556 = vpop.f32.mrf.mxu0
  %557 = vmatprep.mubr.bf16.mxu0 0
  %558 = vmatmul.mubr.bf16.gmra.mxu0 %v191
  %v559 = vpop.f32.mrf.mxu0
  %v560 = vadd.f32 %v339, %v559
  %v561 = vpop.f32.mrf.mxu0
  %v562 = vpop.f32.mrf.mxu0
  %v563 = vadd.f32 %v339, %v562
  %v564 = vpop.f32.mrf.mxu0
  %565 = vmatprep.mubr.bf16.mxu0 0
  %566 = vmatmul.mubr.bf16.gmra.mxu0 %v192
  %v567 = vpop.f32.mrf.mxu0
  %v568 = vadd.f32 %v339, %v567
  %v569 = vpop.f32.mrf.mxu0
  %v570 = vpop.f32.mrf.mxu0
  %v571 = vadd.f32 %v339, %v570
  %v572 = vpop.f32.mrf.mxu0
  %573 = vmatprep.mubr.bf16.mxu0 0
  %574 = vmatmul.mubr.bf16.gmra.mxu0 %v193
  %v575 = vpop.f32.mrf.mxu0
  %v576 = vadd.f32 %v339, %v575
  %v577 = vpop.f32.mrf.mxu0
  %v578 = vpop.f32.mrf.mxu0
  %v579 = vadd.f32 %v339, %v578
  %v580 = vpop.f32.mrf.mxu0
  %581 = vmatprep.mubr.bf16.mxu0 0
  %582 = vmatmul.mubr.bf16.gmra.mxu0 %v194
  %v583 = vpop.f32.mrf.mxu0
  %v584 = vadd.f32 %v339, %v583
  %v585 = vpop.f32.mrf.mxu0
  %v586 = vpop.f32.mrf.mxu0
  %v587 = vadd.f32 %v339, %v586
  %v588 = vpop.f32.mrf.mxu0
  %589 = vmatprep.mubr.bf16.mxu0 0
  %590 = vmatmul.mubr.bf16.gmra.mxu0 %v195
  %v591 = vpop.f32.mrf.mxu0
  %v592 = vadd.f32 %v339, %v591
  %v593 = vpop.f32.mrf.mxu0
  %v594 = vpop.f32.mrf.mxu0
  %v595 = vadd.f32 %v339, %v594
  %v596 = vpop.f32.mrf.mxu0
  %597 = vmatprep.mubr.bf16.mxu0 0
  %598 = vmatmul.mubr.bf16.gmra.mxu0 %v196
  %v599 = vpop.f32.mrf.mxu0
  %v600 = vadd.f32 %v339, %v599
  %v601 = vpop.f32.mrf.mxu0
  %v602 = vpop.f32.mrf.mxu0
  %v603 = vadd.f32 %v339, %v602
  %v604 = vpop.f32.mrf.mxu0
  %605 = vmatprep.mubr.bf16.mxu0 0
  %606 = vmatmul.mubr.bf16.gmra.mxu0 %v197
  %v607 = vpop.f32.mrf.mxu0
  %v608 = vadd.f32 %v339, %v607
  %v609 = vpop.f32.mrf.mxu0
  %v610 = vpop.f32.mrf.mxu0
  %v611 = vadd.f32 %v339, %v610
  %v612 = vpop.f32.mrf.mxu0
  %613 = vdwg.mxu0
  %vm614 = vcmask 1041408
  %v615 = vsel %vm614, %v315, -inf
  %v616 = vsel %vm614, %v316, -inf
  %v617 = vsel %vm614, %v317, -inf
  %v618 = vmax.f32 %v615, %v616
  %v619 = vmax.f32 %v618, %v617
  %620 = vmax.xlane.f32.xlu0 %v619
  %v621 = vpop.xlane.xlu0 %620
  %vm622 = vcmp.eq.f32.partialorder %v315, %v621
  %vm623 = vcmp.eq.f32.partialorder %v316, %v621
  %vm624 = vcmp.eq.f32.partialorder %v317, %v621
  %v625 = vsel %vm622, %v309, 1073741824
  %v626 = vsel %vm623, %v310, 1073741824
  %v627 = vsel %vm624, %v311, 1073741824
  %v628 = vsel %vm614, %v625, 2147483647
  %v629 = vsel %vm614, %v626, 2147483647
  %v630 = vsel %vm614, %v627, 2147483647
  %vm631 = vcmp.lt.s32.totalorder %v628, %v629
  %v632 = vsel %vm631, %v628, %v629
  %vm633 = vcmp.lt.s32.totalorder %v632, %v630
  %v634 = vsel %vm633, %v632, %v630
  %v635 = vand.u32 %v634, 65535
  %v636 = vshra.s32 %v634, 16
  %v637 = vcvt.s32.f32 %v635
  %v638 = vcvt.s32.f32 %v636
  %639 = vmin.xlane.f32.xlu0 %v638
  %v640 = vpop.xlane.xlu0 %639
  %vm641 = vcmp.eq.f32.partialorder %v638, %v640
  %v642 = vsel %vm641, %v637, inf
  %643 = vmin.xlane.f32.xlu0 %v642
  %v644 = vpop.xlane.xlu0 %643
  %v645 = vcvt.f32.s32 %v644
  %v646 = vcvt.f32.s32 %v640
  %v647 = vshll.u32 %v646, 16
  %v648 = vadd.s32 %v647, %v645
  %vm649 = vcmp.eq.s32.totalorder %v309, %v648
  %vm650 = vcmp.eq.s32.totalorder %v310, %v648
  %vm651 = vcmp.eq.s32.totalorder %v311, %v648
  %v652 = vsel %vm649, 1, 0
  %v653 = vsel %vm650, 1, 0
  %v654 = vsel %vm651, 1, 0
  %v655 = vcvt.s32.f32 %v652
  %v656 = vcvt.s32.f32 %v653
  %v657 = vcvt.s32.f32 %v654
  %658 = vmatprep.subr.mxu0 0.0
  %659 = vmatpush1.msra.mxu0 %v483
  %660 = vmatprep.subr.mxu0 0.0
  %661 = vmatpush1.msra.mxu0 %v480
  %662 = vmatprep.subr.mxu0 0.0
  %663 = vmatpush1.msra.mxu0 %v475
  %664 = vmatprep.subr.mxu0 0.0
  %665 = vmatpush1.msra.mxu0 %v472
  %666 = vmatprep.subr.mxu0 0.0
  %667 = vmatpush1.msra.mxu0 %v467
  %668 = vmatprep.subr.mxu0 0.0
  %669 = vmatpush1.msra.mxu0 %v464
  %670 = vmatprep.subr.mxu0 0.0
  %671 = vmatpush1.msra.mxu0 %v459
  %672 = vmatprep.subr.mxu0 0.0
  %673 = vmatpush1.msra.mxu0 %v456
  %674 = vmatprep.subr.mxu0 0.0
  %675 = vmatpush1.msra.mxu0 %v451
  %676 = vmatprep.subr.mxu0 0.0
  %677 = vmatpush1.msra.mxu0 %v448
  %678 = vmatprep.subr.mxu0 0.0
  %679 = vmatpush1.msra.mxu0 %v443
  %680 = vmatprep.subr.mxu0 0.0
  %681 = vmatpush1.msra.mxu0 %v440
  %682 = vmatprep.subr.mxu0 0.0
  %683 = vmatpush1.msra.mxu0 %v435
  %684 = vmatprep.subr.mxu0 0.0
  %685 = vmatpush1.msra.mxu0 %v432
  %686 = vmatprep.subr.mxu0 0.0
  %687 = vmatpush1.msra.mxu0 %v427
  %688 = vmatprep.subr.mxu0 0.0
  %689 = vmatpush1.msra.mxu0 %v424
  %690 = vmatprep.subr.mxu0 0.0
  %691 = vmatpush2.msra.mxu0 %v547
  %692 = vmatprep.subr.mxu0 0.0
  %693 = vmatpush2.msra.mxu0 %v544
  %694 = vmatprep.subr.mxu0 0.0
  %695 = vmatpush2.msra.mxu0 %v539
  %696 = vmatprep.subr.mxu0 0.0
  %697 = vmatpush2.msra.mxu0 %v536
  %698 = vmatprep.subr.mxu0 0.0
  %699 = vmatpush2.msra.mxu0 %v531
  %700 = vmatprep.subr.mxu0 0.0
  %701 = vmatpush2.msra.mxu0 %v528
  %702 = vmatprep.subr.mxu0 0.0
  %703 = vmatpush2.msra.mxu0 %v523
  %704 = vmatprep.subr.mxu0 0.0
  %705 = vmatpush2.msra.mxu0 %v520
  %706 = vmatprep.subr.mxu0 0.0
  %707 = vmatpush2.msra.mxu0 %v515
  %708 = vmatprep.subr.mxu0 0.0
  %709 = vmatpush2.msra.mxu0 %v512
  %710 = vmatprep.subr.mxu0 0.0
  %711 = vmatpush2.msra.mxu0 %v507
  %712 = vmatprep.subr.mxu0 0.0
  %713 = vmatpush2.msra.mxu0 %v504
  %714 = vmatprep.subr.mxu0 0.0
  %715 = vmatpush2.msra.mxu0 %v499
  %716 = vmatprep.subr.mxu0 0.0
  %717 = vmatpush2.msra.mxu0 %v496
  %718 = vmatprep.subr.mxu0 0.0
  %719 = vmatpush2.msra.mxu0 %v491
  %720 = vmatprep.subr.mxu0 0.0
  %721 = vmatpush2.msra.mxu0 %v488
  %722 = vmatprep.mubr.f32.mxu0 %v656
  %723 = vmatmul.mubr.f32.gmra.mxu0 %v655
  %v724 = vpop.f32.mrf.mxu0
  %v725 = vadd.f32 0.0, %v724
  %v726 = vpop.f32.mrf.mxu0
  %727 = vdwg.mxu0
  %728 = vmatprep.subr.mxu0 0.0
  %729 = vmatpush1.msra.mxu0 %v611
  %730 = vmatprep.subr.mxu0 0.0
  %731 = vmatpush1.msra.mxu0 %v608
  %732 = vmatprep.subr.mxu0 0.0
  %733 = vmatpush1.msra.mxu0 %v603
  %734 = vmatprep.subr.mxu0 0.0
  %735 = vmatpush1.msra.mxu0 %v600
  %736 = vmatprep.subr.mxu0 0.0
  %737 = vmatpush1.msra.mxu0 %v595
  %738 = vmatprep.subr.mxu0 0.0
  %739 = vmatpush1.msra.mxu0 %v592
  %740 = vmatprep.subr.mxu0 0.0
  %741 = vmatpush1.msra.mxu0 %v587
  %742 = vmatprep.subr.mxu0 0.0
  %743 = vmatpush1.msra.mxu0 %v584
  %744 = vmatprep.subr.mxu0 0.0
  %745 = vmatpush1.msra.mxu0 %v579
  %746 = vmatprep.subr.mxu0 0.0
  %747 = vmatpush1.msra.mxu0 %v576
  %748 = vmatprep.subr.mxu0 0.0
  %749 = vmatpush1.msra.mxu0 %v571
  %750 = vmatprep.subr.mxu0 0.0
  %751 = vmatpush1.msra.mxu0 %v568
  %752 = vmatprep.subr.mxu0 0.0
  %753 = vmatpush1.msra.mxu0 %v563
  %754 = vmatprep.subr.mxu0 0.0
  %755 = vmatpush1.msra.mxu0 %v560
  %756 = vmatprep.subr.mxu0 0.0
  %757 = vmatpush1.msra.mxu0 %v555
  %758 = vmatprep.subr.mxu0 0.0
  %759 = vmatpush1.msra.mxu0 %v552
  %760 = vmatprep.subr.mxu0 0.0
  %761 = vmatpush2.msra.mxu0 0.0
  %762 = vmatprep.subr.mxu0 0.0
  %763 = vmatpush2.msra.mxu0 0.0
  %764 = vmatprep.subr.mxu0 0.0
  %765 = vmatpush2.msra.mxu0 0.0
  %766 = vmatprep.subr.mxu0 0.0
  %767 = vmatpush2.msra.mxu0 0.0
  %768 = vmatprep.subr.mxu0 0.0
  %769 = vmatpush2.msra.mxu0 0.0
  %770 = vmatprep.subr.mxu0 0.0
  %771 = vmatpush2.msra.mxu0 0.0
  %772 = vmatprep.subr.mxu0 0.0
  %773 = vmatpush2.msra.mxu0 0.0
  %774 = vmatprep.subr.mxu0 0.0
  %775 = vmatpush2.msra.mxu0 0.0
  %776 = vmatprep.subr.mxu0 0.0
  %777 = vmatpush2.msra.mxu0 0.0
  %778 = vmatprep.subr.mxu0 0.0
  %779 = vmatpush2.msra.mxu0 0.0
  %780 = vmatprep.subr.mxu0 0.0
  %781 = vmatpush2.msra.mxu0 0.0
  %782 = vmatprep.subr.mxu0 0.0
  %783 = vmatpush2.msra.mxu0 0.0
  %784 = vmatprep.subr.mxu0 0.0
  %785 = vmatpush2.msra.mxu0 0.0
  %786 = vmatprep.subr.mxu0 0.0
  %787 = vmatpush2.msra.mxu0 0.0
  %788 = vmatprep.subr.mxu0 0.0
  %789 = vmatpush2.msra.mxu0 0.0
  %790 = vmatprep.subr.mxu0 0.0
  %791 = vmatpush2.msra.mxu0 0.0
  %792 = vmatprep.mubr.f32.mxu0 0.0
  %793 = vmatmul.mubr.f32.gmra.mxu0 %v657
  %v794 = vpop.f32.mrf.mxu0
  %v795 = vadd.f32 %v725, %v794
  %v796 = vpop.f32.mrf.mxu0
  %797 = vdwg.mxu0
  %p798 = scmp.eq.s32.totalorder 0, 0
  // Predicated region
  $region22: #{dsmil_forward.3} parent=0 // pred_check
    %p799 = pneg %p798
  $region23: #{dsmil_forward.3} parent=0 // pred_check_branch
    %801 = sbr.rel (%p799) target = $region25
  $region24: #{dsmil_forward.3} parent=0 // pred_region
    %vm802 = vcmask 1024
    %803 = vst.msk [vmem:[%s5] sm:$0x3] %vm802, -1e+30
    %vm804 = vcmask 517120
    %805 = vst.msk [vmem:[%s6] sm:$0x3] %vm804, 0.0
  $region25: #{dsmil_forward.3} parent=0 // pred_fallthru
    _
  %v806 = vld [vmem:[%s5] sm:$0x3]
  %vm807 = vcmp.gt.f32.partialorder %v621, %v806
  %v808 = vsel %vm807, %v621, %v806
  %vm809 = vcmask 1024
  %810 = vst.msk [vmem:[%s5] sm:$0x3] %vm809, %v808
  %v811 = vld [vmem:[%s6] sm:$0x3]
  %v812 = vsel %vm807, 1, 0
  %813 = vset.pattern.permute.xlu0 0
  %814 = vperm.xlu0 %813, %v812
  %v815 = vpop.permute.xlu0 %814
  %vm816 = vcmp.eq.s32.totalorder %v815, 1
  %v817 = vsel %vm816, %v795, %v811
  %vm818 = vcmask 517120
  %819 = vst.msk [vmem:[%s6] sm:$0x3] %vm818, %v817
  // Predicated region
  $region26: #{dsmil_forward.3} parent=0 // pred_check
    _
  $region27: #{dsmil_forward.3} parent=0 // pred_check_branch
    %821 = sbr.rel (0) target = $region29
  $region28: #{dsmil_forward.3} parent=0 // pred_region
    _
  $region29: #{dsmil_forward.3} parent=0 // pred_fallthru
    _
  // Predicated region
  $region30: #{dsmil_forward.3} parent=0 // pred_check
    _
  $region31: #{dsmil_forward.3} parent=0 // pred_check_branch
    %823 = sbr.rel (0) target = $region33
  $region32: #{dsmil_forward.3} parent=0 // pred_region
    _
  $region33: #{dsmil_forward.3} parent=0 // pred_fallthru
    _
  // Predicated region
  $region34: #{dsmil_forward.3} parent=0 // pred_check
    _
  $region35: #{dsmil_forward.3} parent=0 // pred_check_branch
    %825 = sbr.rel (0) target = $region37
  $region36: #{dsmil_forward.3} parent=0 // pred_region
    _
  $region37: #{dsmil_forward.3} parent=0 // pred_fallthru
    _
  // Predicated region
  $region38: #{dsmil_forward.3} parent=0 // pred_check
    _
  $region39: #{dsmil_forward.3} parent=0 // pred_check_branch
    %827 = sbr.rel (0) target = $region41
  $region40: #{dsmil_forward.3} parent=0 // pred_region
    _
  $region41: #{dsmil_forward.3} parent=0 // pred_fallthru
    _

// kernel: dsmil_forward.4
$region0: #{dsmil_forward.4}
  #allocation0 [shape = 'u32[]', space=smem, size = 0x4, offset = 0x4, fixed_abs, tag = 'smem constant byte address 0x4 - core index']
  #allocation1 [shape = 'u32[144,128]{1,0:T(1,128)}', space=vmem, size = 0x12000, scoped, tag = 'internal scratch']
  %s0 = inlined_call_operand.vmem [shape: bf16[384,128], index: 0, kind: input, shape index: {}]
  %s1 = inlined_call_operand.vmem [shape: bf16[128,128], index: 1, kind: input, shape index: {}]
  %s2 = inlined_call_operand.vmem [shape: f32[1,128], index: 2, kind: input, shape index: {}]
  %s3 = inlined_call_operand.vmem [shape: f32[2,128], index: 3, kind: input, shape index: {}]
  %s4 = inlined_call_operand.vmem [shape: f32[256,2], index: 4, kind: input, shape index: {}]
  %s5 = inlined_call_operand.vmem [shape: f32[1,2], index: 5, kind: input, shape index: {}]
  %s6 = inlined_call_operand.vmem [shape: f32[1,2], index: 6, kind: input, shape index: {}]
  %s7 = inlined_call_operand.vmem [shape: f32[2,384], index: 7, kind: output, shape index: {0}]
  %s8 = inlined_call_operand.vmem [shape: f32[2,1], index: 8, kind: output, shape index: {1}]
  %s9 = inlined_call_operand.vmem [shape: f32[2,1], index: 9, kind: output, shape index: {2}]
  %s10 = inlined_call_operand.vmem [shape: f32[2,128], index: 10, kind: output, shape index: {3}]
  %s11 = inlined_call_operand.hbm [shape: f32[1,2], index: 11, kind: output, shape index: {4}]
  %12 = xla_tuple %s7, %s8, %s9, %s10, %s11
  %s13 = sld [smem:[#allocation0]]
  $region78: #{dsmil_forward.4} parent=0
    _
  %s15 = ssub.s32 1, %s13
  %s16 = scalar_select 0, %s15, %s13
  $region1: #{dsmil_forward.4} parent=0
    #allocation2 [shape = 'u8[512]{0}', space=vmem, size = 0x400, scoped, tag = 'output window, operand 4, single buffered']
    #allocation3 [shape = 's32[1]{0}', space=sflag, size = 0x4, scoped, tag = 'scoped memory for dsmil_forward.4']
    %17 = vsyncpa [#allocation3], 0
    // Predicated region
    $region2: #{dsmil_forward.4} parent=1 // pred_check
      _
    $region3: #{dsmil_forward.4} parent=1 // pred_check_branch
      %19 = sbr.rel (0) target = $region5
    $region4: #{dsmil_forward.4} parent=1 // pred_region
      _
    $region5: #{dsmil_forward.4} parent=1 // pred_fallthru
      _
    // Predicated region
    $region6: #{dsmil_forward.4} parent=1 // pred_check
      _
    $region7: #{dsmil_forward.4} parent=1 // pred_check_branch
      %21 = sbr.rel (0) target = $region9
    $region8: #{dsmil_forward.4} parent=1 // pred_region
      _
    $region9: #{dsmil_forward.4} parent=1 // pred_fallthru
      _
    // Predicated region
    $region10: #{dsmil_forward.4} parent=1 // pred_check
      _
    $region11: #{dsmil_forward.4} parent=1 // pred_check_branch
      %23 = sbr.rel (0) target = $region13
    $region12: #{dsmil_forward.4} parent=1 // pred_region
      _
    $region13: #{dsmil_forward.4} parent=1 // pred_fallthru
      _
    // Predicated region
    $region14: #{dsmil_forward.4} parent=1 // pred_check
      _
    $region15: #{dsmil_forward.4} parent=1 // pred_check_branch
      %25 = sbr.rel (0) target = $region17
    $region16: #{dsmil_forward.4} parent=1 // pred_region
      _
    $region17: #{dsmil_forward.4} parent=1 // pred_fallthru
      _
    // Predicated region
    $region18: #{dsmil_forward.4} parent=1 // pred_check
      _
    $region19: #{dsmil_forward.4} parent=1 // pred_check_branch
      %27 = sbr.rel (0) target = $region21
    $region20: #{dsmil_forward.4} parent=1 // pred_region
      _
    $region21: #{dsmil_forward.4} parent=1 // pred_fallthru
      _
    // Predicated region
    $region22: #{dsmil_forward.4} parent=1 // pred_check
      _
    $region23: #{dsmil_forward.4} parent=1 // pred_check_branch
      %29 = sbr.rel (0) target = $region25
    $region24: #{dsmil_forward.4} parent=1 // pred_region
      _
    $region25: #{dsmil_forward.4} parent=1 // pred_fallthru
      _
    // Predicated region
    $region26: #{dsmil_forward.4} parent=1 // pred_check
      _
    $region27: #{dsmil_forward.4} parent=1 // pred_check_branch
      %31 = sbr.rel (0) target = $region29
    $region28: #{dsmil_forward.4} parent=1 // pred_region
      _
    $region29: #{dsmil_forward.4} parent=1 // pred_fallthru
      _
    %v33 = vld [vmem:[%s0] sm:$0xf]
    %v34 = vld [vmem:[%s0 + $0x4] sm:$0xf]
    %v35 = vld [vmem:[%s0 + $0x8] sm:$0xf]
    %v36 = vld [vmem:[%s0 + $0xc] sm:$0xf]
    %v37 = vld [vmem:[%s0 + $0x10] sm:$0xf]
    %v38 = vld [vmem:[%s0 + $0x14] sm:$0xf]
    %v39 = vld [vmem:[%s0 + $0x18] sm:$0xf]
    %v40 = vld [vmem:[%s0 + $0x1c] sm:$0xf]
    %v41 = vld [vmem:[%s0 + $0x20] sm:$0xf]
    %v42 = vld [vmem:[%s0 + $0x24] sm:$0xf]
    %v43 = vld [vmem:[%s0 + $0x28] sm:$0xf]
    %v44 = vld [vmem:[%s0 + $0x2c] sm:$0xf]
    %v45 = vld [vmem:[%s0 + $0x30] sm:$0xf]
    %v46 = vld [vmem:[%s0 + $0x34] sm:$0xf]
    %v47 = vld [vmem:[%s0 + $0x38] sm:$0xf]
    %v48 = vld [vmem:[%s0 + $0x3c] sm:$0xf]
    %v49 = vld [vmem:[%s0 + $0x40] sm:$0xf]
    %v50 = vld [vmem:[%s0 + $0x44] sm:$0xf]
    %v51 = vld [vmem:[%s0 + $0x48] sm:$0xf]
    %v52 = vld [vmem:[%s0 + $0x4c] sm:$0xf]
    %v53 = vld [vmem:[%s0 + $0x50] sm:$0xf]
    %v54 = vld [vmem:[%s0 + $0x54] sm:$0xf]
    %v55 = vld [vmem:[%s0 + $0x58] sm:$0xf]
    %v56 = vld [vmem:[%s0 + $0x5c] sm:$0xf]
    %v57 = vld [vmem:[%s0 + $0x60] sm:$0xf]
    %v58 = vld [vmem:[%s0 + $0x64] sm:$0xf]
    %v59 = vld [vmem:[%s0 + $0x68] sm:$0xf]
    %v60 = vld [vmem:[%s0 + $0x6c] sm:$0xf]
    %v61 = vld [vmem:[%s0 + $0x70] sm:$0xf]
    %v62 = vld [vmem:[%s0 + $0x74] sm:$0xf]
    %v63 = vld [vmem:[%s0 + $0x78] sm:$0xf]
    %v64 = vld [vmem:[%s0 + $0x7c] sm:$0xf]
    %v65 = vld [vmem:[%s0 + $0x80] sm:$0xf]
    %v66 = vld [vmem:[%s0 + $0x84] sm:$0xf]
    %v67 = vld [vmem:[%s0 + $0x88] sm:$0xf]
    %v68 = vld [vmem:[%s0 + $0x8c] sm:$0xf]
    %v69 = vld [vmem:[%s0 + $0x90] sm:$0xf]
    %v70 = vld [vmem:[%s0 + $0x94] sm:$0xf]
    %v71 = vld [vmem:[%s0 + $0x98] sm:$0xf]
    %v72 = vld [vmem:[%s0 + $0x9c] sm:$0xf]
    %v73 = vld [vmem:[%s0 + $0xa0] sm:$0xf]
    %v74 = vld [vmem:[%s0 + $0xa4] sm:$0xf]
    %v75 = vld [vmem:[%s0 + $0xa8] sm:$0xf]
    %v76 = vld [vmem:[%s0 + $0xac] sm:$0xf]
    %v77 = vld [vmem:[%s0 + $0xb0] sm:$0xf]
    %v78 = vld [vmem:[%s0 + $0xb4] sm:$0xf]
    %v79 = vld [vmem:[%s0 + $0xb8] sm:$0xf]
    %v80 = vld [vmem:[%s0 + $0xbc] sm:$0xf]
    %v81 = vld [vmem:[%s1] sm:$0xf]
    %v82 = vld [vmem:[%s1 + $0x4] sm:$0xf]
    %v83 = vld [vmem:[%s1 + $0x8] sm:$0xf]
    %v84 = vld [vmem:[%s1 + $0xc] sm:$0xf]
    %v85 = vld [vmem:[%s1 + $0x10] sm:$0xf]
    %v86 = vld [vmem:[%s1 + $0x14] sm:$0xf]
    %v87 = vld [vmem:[%s1 + $0x18] sm:$0xf]
    %v88 = vld [vmem:[%s1 + $0x1c] sm:$0xf]
    %v89 = vld [vmem:[%s1 + $0x20] sm:$0xf]
    %v90 = vld [vmem:[%s1 + $0x24] sm:$0xf]
    %v91 = vld [vmem:[%s1 + $0x28] sm:$0xf]
    %v92 = vld [vmem:[%s1 + $0x2c] sm:$0xf]
    %v93 = vld [vmem:[%s1 + $0x30] sm:$0xf]
    %v94 = vld [vmem:[%s1 + $0x34] sm:$0xf]
    %v95 = vld [vmem:[%s1 + $0x38] sm:$0xf]
    %v96 = vld [vmem:[%s1 + $0x3c] sm:$0xf]
    %v97 = vld [vmem:[%s2] sm:$0x1]
    %v99 = vlaneseq
    %v100 = vshrl.u32 %v99, 7
    %v101 = vsub.s32 0, %v100
    %v102 = vrot.slane %v97, %v101
    %v152 = vunpack.c.l.b16 %v33
    %v153 = vunpack.c.l.b16 %v34
    %v154 = vunpack.c.l.b16 %v35
    %v155 = vunpack.c.l.b16 %v36
    %v156 = vunpack.c.l.b16 %v37
    %v157 = vunpack.c.l.b16 %v38
    %v158 = vunpack.c.l.b16 %v39
    %v159 = vunpack.c.l.b16 %v40
    %v160 = vunpack.c.l.b16 %v41
    %v161 = vunpack.c.l.b16 %v42
    %v162 = vunpack.c.l.b16 %v43
    %v163 = vunpack.c.l.b16 %v44
    %v164 = vunpack.c.l.b16 %v45
    %v165 = vunpack.c.l.b16 %v46
    %v166 = vunpack.c.l.b16 %v47
    %v167 = vunpack.c.l.b16 %v48
    %v168 = vunpack.c.l.b16 %v49
    %v169 = vunpack.c.l.b16 %v50
    %v170 = vunpack.c.l.b16 %v51
    %v171 = vunpack.c.l.b16 %v52
    %v172 = vunpack.c.l.b16 %v53
    %v173 = vunpack.c.l.b16 %v54
    %v174 = vunpack.c.l.b16 %v55
    %v175 = vunpack.c.l.b16 %v56
    %v176 = vunpack.c.l.b16 %v57
    %v177 = vunpack.c.l.b16 %v58
    %v178 = vunpack.c.l.b16 %v59
    %v179 = vunpack.c.l.b16 %v60
    %v180 = vunpack.c.l.b16 %v61
    %v181 = vunpack.c.l.b16 %v62
    %v182 = vunpack.c.l.b16 %v63
    %v183 = vunpack.c.l.b16 %v64
    %v184 = vunpack.c.l.b16 %v65
    %v185 = vunpack.c.l.b16 %v66
    %v186 = vunpack.c.l.b16 %v67
    %v187 = vunpack.c.l.b16 %v68
    %v188 = vunpack.c.l.b16 %v69
    %v189 = vunpack.c.l.b16 %v70
    %v190 = vunpack.c.l.b16 %v71
    %v191 = vunpack.c.l.b16 %v72
    %v192 = vunpack.c.l.b16 %v73
    %v193 = vunpack.c.l.b16 %v74
    %v194 = vunpack.c.l.b16 %v75
    %v195 = vunpack.c.l.b16 %v76
    %v196 = vunpack.c.l.b16 %v77
    %v197 = vunpack.c.l.b16 %v78
    %v198 = vunpack.c.l.b16 %v79
    %v199 = vunpack.c.l.b16 %v80
    %v200 = vpack.c.b16 %v153, %v152
    %v201 = vpack.c.b16 %v155, %v154
    %v202 = vpack.c.b16 %v157, %v156
    %v203 = vpack.c.b16 %v159, %v158
    %v204 = vpack.c.b16 %v161, %v160
    %v205 = vpack.c.b16 %v163, %v162
    %v206 = vpack.c.b16 %v165, %v164
    %v207 = vpack.c.b16 %v167, %v166
    %v208 = vpack.c.b16 %v169, %v168
    %v209 = vpack.c.b16 %v171, %v170
    %v210 = vpack.c.b16 %v173, %v172
    %v211 = vpack.c.b16 %v175, %v174
    %v212 = vpack.c.b16 %v177, %v176
    %v213 = vpack.c.b16 %v179, %v178
    %v214 = vpack.c.b16 %v181, %v180
    %v215 = vpack.c.b16 %v183, %v182
    %v216 = vpack.c.b16 %v185, %v184
    %v217 = vpack.c.b16 %v187, %v186
    %v218 = vpack.c.b16 %v189, %v188
    %v219 = vpack.c.b16 %v191, %v190
    %v220 = vpack.c.b16 %v193, %v192
    %v221 = vpack.c.b16 %v195, %v194
    %v222 = vpack.c.b16 %v197, %v196
    %v223 = vpack.c.b16 %v199, %v198
    %v264 = vunpack.c.l.b16 %v81
    %v265 = vunpack.c.l.b16 %v82
    %v266 = vunpack.c.l.b16 %v83
    %v267 = vunpack.c.l.b16 %v84
    %v268 = vunpack.c.l.b16 %v85
    %v269 = vunpack.c.l.b16 %v86
    %v270 = vunpack.c.l.b16 %v87
    %v271 = vunpack.c.l.b16 %v88
    %v272 = vunpack.c.l.b16 %v89
    %v273 = vunpack.c.l.b16 %v90
    %v274 = vunpack.c.l.b16 %v91
    %v275 = vunpack.c.l.b16 %v92
    %v276 = vunpack.c.l.b16 %v93
    %v277 = vunpack.c.l.b16 %v94
    %v278 = vunpack.c.l.b16 %v95
    %v279 = vunpack.c.l.b16 %v96
    %v280 = vpack.c.b16 %v265, %v264
    %v281 = vpack.c.b16 %v267, %v266
    %v282 = vpack.c.b16 %v269, %v268
    %v283 = vpack.c.b16 %v271, %v270
    %v284 = vpack.c.b16 %v273, %v272
    %v285 = vpack.c.b16 %v275, %v274
    %v286 = vpack.c.b16 %v277, %v276
    %v287 = vpack.c.b16 %v279, %v278
    %296 = vmatprep.subr.bf16.mxu0 0
    %297 = vmatpush1.bf16.msra.mxu0 %v287
    %298 = vmatprep.subr.bf16.mxu0 0
    %299 = vmatpush1.bf16.msra.mxu0 %v286
    %300 = vmatprep.subr.bf16.mxu0 0
    %301 = vmatpush1.bf16.msra.mxu0 %v285
    %302 = vmatprep.subr.bf16.mxu0 0
    %303 = vmatpush1.bf16.msra.mxu0 %v284
    %304 = vmatprep.subr.bf16.mxu0 0
    %305 = vmatpush1.bf16.msra.mxu0 %v283
    %306 = vmatprep.subr.bf16.mxu0 0
    %307 = vmatpush1.bf16.msra.mxu0 %v282
    %308 = vmatprep.subr.bf16.mxu0 0
    %309 = vmatpush1.bf16.msra.mxu0 %v281
    %310 = vmatprep.subr.bf16.mxu0 0
    %311 = vmatpush1.bf16.msra.mxu0 %v280
    %312 = vmatprep.subr.bf16.mxu0 0
    %313 = vmatpush2.bf16.msra.mxu0 0
    %314 = vmatprep.subr.bf16.mxu0 0
    %315 = vmatpush2.bf16.msra.mxu0 0
    %316 = vmatprep.subr.bf16.mxu0 0
    %317 = vmatpush2.bf16.msra.mxu0 0
    %318 = vmatprep.subr.bf16.mxu0 0
    %319 = vmatpush2.bf16.msra.mxu0 0
    %320 = vmatprep.subr.bf16.mxu0 0
    %321 = vmatpush2.bf16.msra.mxu0 0
    %322 = vmatprep.subr.bf16.mxu0 0
    %323 = vmatpush2.bf16.msra.mxu0 0
    %324 = vmatprep.subr.bf16.mxu0 0
    %325 = vmatpush2.bf16.msra.mxu0 0
    %326 = vmatprep.subr.bf16.mxu0 0
    %327 = vmatpush2.bf16.msra.mxu0 0
    %328 = vmatprep.mubr.bf16.mxu0 0
    %329 = vmatmul.mubr.bf16.gmra.mxu0 %v200
    %v330 = vpop.f32.mrf.mxu0
    %v331 = vadd.f32 %v102, %v330
    %v332 = vpop.f32.mrf.mxu0
    %v333 = vpop.f32.mrf.mxu0
    %v334 = vadd.f32 %v102, %v333
    %v335 = vpop.f32.mrf.mxu0
    %336 = vmatprep.mubr.bf16.mxu0 0
    %337 = vmatmul.mubr.bf16.gmra.mxu0 %v201
    %v338 = vpop.f32.mrf.mxu0
    %v339 = vadd.f32 %v102, %v338
    %v340 = vpop.f32.mrf.mxu0
    %v341 = vpop.f32.mrf.mxu0
    %v342 = vadd.f32 %v102, %v341
    %v343 = vpop.f32.mrf.mxu0
    %344 = vmatprep.mubr.bf16.mxu0 0
    %345 = vmatmul.mubr.bf16.gmra.mxu0 %v202
    %v346 = vpop.f32.mrf.mxu0
    %v347 = vadd.f32 %v102, %v346
    %v348 = vpop.f32.mrf.mxu0
    %v349 = vpop.f32.mrf.mxu0
    %v350 = vadd.f32 %v102, %v349
    %v351 = vpop.f32.mrf.mxu0
    %352 = vmatprep.mubr.bf16.mxu0 0
    %353 = vmatmul.mubr.bf16.gmra.mxu0 %v203
    %v354 = vpop.f32.mrf.mxu0
    %v355 = vadd.f32 %v102, %v354
    %v356 = vpop.f32.mrf.mxu0
    %v357 = vpop.f32.mrf.mxu0
    %v358 = vadd.f32 %v102, %v357
    %v359 = vpop.f32.mrf.mxu0
    %360 = vmatprep.mubr.bf16.mxu0 0
    %361 = vmatmul.mubr.bf16.gmra.mxu0 %v204
    %v362 = vpop.f32.mrf.mxu0
    %v363 = vadd.f32 %v102, %v362
    %v364 = vpop.f32.mrf.mxu0
    %v365 = vpop.f32.mrf.mxu0
    %v366 = vadd.f32 %v102, %v365
    %v367 = vpop.f32.mrf.mxu0
    %368 = vmatprep.mubr.bf16.mxu0 0
    %369 = vmatmul.mubr.bf16.gmra.mxu0 %v205
    %v370 = vpop.f32.mrf.mxu0
    %v371 = vadd.f32 %v102, %v370
    %v372 = vpop.f32.mrf.mxu0
    %v373 = vpop.f32.mrf.mxu0
    %v374 = vadd.f32 %v102, %v373
    %v375 = vpop.f32.mrf.mxu0
    %376 = vmatprep.mubr.bf16.mxu0 0
    %377 = vmatmul.mubr.bf16.gmra.mxu0 %v206
    %v378 = vpop.f32.mrf.mxu0
    %v379 = vadd.f32 %v102, %v378
    %v380 = vpop.f32.mrf.mxu0
    %v381 = vpop.f32.mrf.mxu0
    %v382 = vadd.f32 %v102, %v381
    %v383 = vpop.f32.mrf.mxu0
    %384 = vmatprep.mubr.bf16.mxu0 0
    %385 = vmatmul.mubr.bf16.gmra.mxu0 %v207
    %v386 = vpop.f32.mrf.mxu0
    %v387 = vadd.f32 %v102, %v386
    %v388 = vpop.f32.mrf.mxu0
    %v389 = vpop.f32.mrf.mxu0
    %v390 = vadd.f32 %v102, %v389
    %v391 = vpop.f32.mrf.mxu0
    %392 = vmatprep.mubr.bf16.mxu0 0
    %393 = vmatmul.mubr.bf16.gmra.mxu0 %v208
    %v394 = vpop.f32.mrf.mxu0
    %v395 = vadd.f32 %v102, %v394
    %v396 = vpop.f32.mrf.mxu0
    %v397 = vpop.f32.mrf.mxu0
    %v398 = vadd.f32 %v102, %v397
    %v399 = vpop.f32.mrf.mxu0
    %400 = vmatprep.mubr.bf16.mxu0 0
    %401 = vmatmul.mubr.bf16.gmra.mxu0 %v209
    %v402 = vpop.f32.mrf.mxu0
    %v403 = vadd.f32 %v102, %v402
    %v404 = vpop.f32.mrf.mxu0
    %v405 = vpop.f32.mrf.mxu0
    %v406 = vadd.f32 %v102, %v405
    %v407 = vpop.f32.mrf.mxu0
    %408 = vmatprep.mubr.bf16.mxu0 0
    %409 = vmatmul.mubr.bf16.gmra.mxu0 %v210
    %v410 = vpop.f32.mrf.mxu0
    %v411 = vadd.f32 %v102, %v410
    %v412 = vpop.f32.mrf.mxu0
    %v413 = vpop.f32.mrf.mxu0
    %v414 = vadd.f32 %v102, %v413
    %v415 = vpop.f32.mrf.mxu0
    %416 = vmatprep.mubr.bf16.mxu0 0
    %417 = vmatmul.mubr.bf16.gmra.mxu0 %v211
    %v418 = vpop.f32.mrf.mxu0
    %v419 = vadd.f32 %v102, %v418
    %v420 = vpop.f32.mrf.mxu0
    %v421 = vpop.f32.mrf.mxu0
    %v422 = vadd.f32 %v102, %v421
    %v423 = vpop.f32.mrf.mxu0
    %424 = vmatprep.mubr.bf16.mxu0 0
    %425 = vmatmul.mubr.bf16.gmra.mxu0 %v212
    %v426 = vpop.f32.mrf.mxu0
    %v427 = vadd.f32 %v102, %v426
    %v428 = vpop.f32.mrf.mxu0
    %v429 = vpop.f32.mrf.mxu0
    %v430 = vadd.f32 %v102, %v429
    %v431 = vpop.f32.mrf.mxu0
    %432 = vmatprep.mubr.bf16.mxu0 0
    %433 = vmatmul.mubr.bf16.gmra.mxu0 %v213
    %v434 = vpop.f32.mrf.mxu0
    %v435 = vadd.f32 %v102, %v434
    %v436 = vpop.f32.mrf.mxu0
    %v437 = vpop.f32.mrf.mxu0
    %v438 = vadd.f32 %v102, %v437
    %v439 = vpop.f32.mrf.mxu0
    %440 = vmatprep.mubr.bf16.mxu0 0
    %441 = vmatmul.mubr.bf16.gmra.mxu0 %v214
    %v442 = vpop.f32.mrf.mxu0
    %v443 = vadd.f32 %v102, %v442
    %v444 = vpop.f32.mrf.mxu0
    %v445 = vpop.f32.mrf.mxu0
    %v446 = vadd.f32 %v102, %v445
    %v447 = vpop.f32.mrf.mxu0
    %448 = vmatprep.mubr.bf16.mxu0 0
    %449 = vmatmul.mubr.bf16.gmra.mxu0 %v215
    %v450 = vpop.f32.mrf.mxu0
    %v451 = vadd.f32 %v102, %v450
    %v452 = vpop.f32.mrf.mxu0
    %v453 = vpop.f32.mrf.mxu0
    %v454 = vadd.f32 %v102, %v453
    %v455 = vpop.f32.mrf.mxu0
    %456 = vmatprep.mubr.bf16.mxu0 0
    %457 = vmatmul.mubr.bf16.gmra.mxu0 %v216
    %v458 = vpop.f32.mrf.mxu0
    %v459 = vadd.f32 %v102, %v458
    %v460 = vpop.f32.mrf.mxu0
    %v461 = vpop.f32.mrf.mxu0
    %v462 = vadd.f32 %v102, %v461
    %v463 = vpop.f32.mrf.mxu0
    %464 = vmatprep.mubr.bf16.mxu0 0
    %465 = vmatmul.mubr.bf16.gmra.mxu0 %v217
    %v466 = vpop.f32.mrf.mxu0
    %v467 = vadd.f32 %v102, %v466
    %v468 = vpop.f32.mrf.mxu0
    %v469 = vpop.f32.mrf.mxu0
    %v470 = vadd.f32 %v102, %v469
    %v471 = vpop.f32.mrf.mxu0
    %472 = vmatprep.mubr.bf16.mxu0 0
    %473 = vmatmul.mubr.bf16.gmra.mxu0 %v218
    %v474 = vpop.f32.mrf.mxu0
    %v475 = vadd.f32 %v102, %v474
    %v476 = vpop.f32.mrf.mxu0
    %v477 = vpop.f32.mrf.mxu0
    %v478 = vadd.f32 %v102, %v477
    %v479 = vpop.f32.mrf.mxu0
    %480 = vmatprep.mubr.bf16.mxu0 0
    %481 = vmatmul.mubr.bf16.gmra.mxu0 %v219
    %v482 = vpop.f32.mrf.mxu0
    %v483 = vadd.f32 %v102, %v482
    %v484 = vpop.f32.mrf.mxu0
    %v485 = vpop.f32.mrf.mxu0
    %v486 = vadd.f32 %v102, %v485
    %v487 = vpop.f32.mrf.mxu0
    %488 = vmatprep.mubr.bf16.mxu0 0
    %489 = vmatmul.mubr.bf16.gmra.mxu0 %v220
    %v490 = vpop.f32.mrf.mxu0
    %v491 = vadd.f32 %v102, %v490
    %v492 = vpop.f32.mrf.mxu0
    %v493 = vpop.f32.mrf.mxu0
    %v494 = vadd.f32 %v102, %v493
    %v495 = vpop.f32.mrf.mxu0
    %496 = vmatprep.mubr.bf16.mxu0 0
    %497 = vmatmul.mubr.bf16.gmra.mxu0 %v221
    %v498 = vpop.f32.mrf.mxu0
    %v499 = vadd.f32 %v102, %v498
    %v500 = vpop.f32.mrf.mxu0
    %v501 = vpop.f32.mrf.mxu0
    %v502 = vadd.f32 %v102, %v501
    %v503 = vpop.f32.mrf.mxu0
    %504 = vmatprep.mubr.bf16.mxu0 0
    %505 = vmatmul.mubr.bf16.gmra.mxu0 %v222
    %v506 = vpop.f32.mrf.mxu0
    %v507 = vadd.f32 %v102, %v506
    %v508 = vpop.f32.mrf.mxu0
    %v509 = vpop.f32.mrf.mxu0
    %v510 = vadd.f32 %v102, %v509
    %v511 = vpop.f32.mrf.mxu0
    %512 = vmatprep.mubr.bf16.mxu0 0
    %513 = vmatmul.mubr.bf16.gmra.mxu0 %v223
    %v514 = vpop.f32.mrf.mxu0
    %v515 = vadd.f32 %v102, %v514
    %v516 = vpop.f32.mrf.mxu0
    %v517 = vpop.f32.mrf.mxu0
    %v518 = vadd.f32 %v102, %v517
    %v519 = vpop.f32.mrf.mxu0
    %520 = vdwg.mxu0
    %v521 = vld [vmem:[%s3] sm:$0x3]
    %522 = vmatprep.subr.mxu0 0.0
    %523 = vmatpush1.xpose.msra.mxu0 %v390
    %524 = vmatprep.subr.mxu0 0.0
    %525 = vmatpush1.xpose.msra.mxu0 %v387
    %526 = vmatprep.subr.mxu0 0.0
    %527 = vmatpush1.xpose.msra.mxu0 %v382
    %528 = vmatprep.subr.mxu0 0.0
    %529 = vmatpush1.xpose.msra.mxu0 %v379
    %530 = vmatprep.subr.mxu0 0.0
    %531 = vmatpush1.xpose.msra.mxu0 %v374
    %532 = vmatprep.subr.mxu0 0.0
    %533 = vmatpush1.xpose.msra.mxu0 %v371
    %534 = vmatprep.subr.mxu0 0.0
    %535 = vmatpush1.xpose.msra.mxu0 %v366
    %536 = vmatprep.subr.mxu0 0.0
    %537 = vmatpush1.xpose.msra.mxu0 %v363
    %538 = vmatprep.subr.mxu0 0.0
    %539 = vmatpush1.xpose.msra.mxu0 %v358
    %540 = vmatprep.subr.mxu0 0.0
    %541 = vmatpush1.xpose.msra.mxu0 %v355
    %542 = vmatprep.subr.mxu0 0.0
    %543 = vmatpush1.xpose.msra.mxu0 %v350
    %544 = vmatprep.subr.mxu0 0.0
    %545 = vmatpush1.xpose.msra.mxu0 %v347
    %546 = vmatprep.subr.mxu0 0.0
    %547 = vmatpush1.xpose.msra.mxu0 %v342
    %548 = vmatprep.subr.mxu0 0.0
    %549 = vmatpush1.xpose.msra.mxu0 %v339
    %550 = vmatprep.subr.mxu0 0.0
    %551 = vmatpush1.xpose.msra.mxu0 %v334
    %552 = vmatprep.subr.mxu0 0.0
    %553 = vmatpush1.xpose.msra.mxu0 %v331
    %554 = vmatprep.subr.mxu0 0.0
    %555 = vmatpush2.xpose.msra.mxu0 %v454
    %556 = vmatprep.subr.mxu0 0.0
    %557 = vmatpush2.xpose.msra.mxu0 %v451
    %558 = vmatprep.subr.mxu0 0.0
    %559 = vmatpush2.xpose.msra.mxu0 %v446
    %560 = vmatprep.subr.mxu0 0.0
    %561 = vmatpush2.xpose.msra.mxu0 %v443
    %562 = vmatprep.subr.mxu0 0.0
    %563 = vmatpush2.xpose.msra.mxu0 %v438
    %564 = vmatprep.subr.mxu0 0.0
    %565 = vmatpush2.xpose.msra.mxu0 %v435
    %566 = vmatprep.subr.mxu0 0.0
    %567 = vmatpush2.xpose.msra.mxu0 %v430
    %568 = vmatprep.subr.mxu0 0.0
    %569 = vmatpush2.xpose.msra.mxu0 %v427
    %570 = vmatprep.subr.mxu0 0.0
    %571 = vmatpush2.xpose.msra.mxu0 %v422
    %572 = vmatprep.subr.mxu0 0.0
    %573 = vmatpush2.xpose.msra.mxu0 %v419
    %574 = vmatprep.subr.mxu0 0.0
    %575 = vmatpush2.xpose.msra.mxu0 %v414
    %576 = vmatprep.subr.mxu0 0.0
    %577 = vmatpush2.xpose.msra.mxu0 %v411
    %578 = vmatprep.subr.mxu0 0.0
    %579 = vmatpush2.xpose.msra.mxu0 %v406
    %580 = vmatprep.subr.mxu0 0.0
    %581 = vmatpush2.xpose.msra.mxu0 %v403
    %582 = vmatprep.subr.mxu0 0.0
    %583 = vmatpush2.xpose.msra.mxu0 %v398
    %584 = vmatprep.subr.mxu0 0.0
    %585 = vmatpush2.xpose.msra.mxu0 %v395
    %586 = vmatprep.mubr.f32.mxu0 0.0
    %587 = vmatmul.mubr.f32.gmra.mxu0 %v521
    %v588 = vpop.f32.mrf.mxu0
    %v589 = vadd.f32 0.0, %v588
    %v590 = vpop.f32.mrf.mxu0
    %v591 = vadd.f32 0.0, %v590
    %592 = vdwg.mxu0
    %593 = vmatprep.subr.mxu0 0.0
    %594 = vmatpush1.xpose.msra.mxu0 %v518
    %595 = vmatprep.subr.mxu0 0.0
    %596 = vmatpush1.xpose.msra.mxu0 %v515
    %597 = vmatprep.subr.mxu0 0.0
    %598 = vmatpush1.xpose.msra.mxu0 %v510
    %599 = vmatprep.subr.mxu0 0.0
    %600 = vmatpush1.xpose.msra.mxu0 %v507
    %601 = vmatprep.subr.mxu0 0.0
    %602 = vmatpush1.xpose.msra.mxu0 %v502
    %603 = vmatprep.subr.mxu0 0.0
    %604 = vmatpush1.xpose.msra.mxu0 %v499
    %605 = vmatprep.subr.mxu0 0.0
    %606 = vmatpush1.xpose.msra.mxu0 %v494
    %607 = vmatprep.subr.mxu0 0.0
    %608 = vmatpush1.xpose.msra.mxu0 %v491
    %609 = vmatprep.subr.mxu0 0.0
    %610 = vmatpush1.xpose.msra.mxu0 %v486
    %611 = vmatprep.subr.mxu0 0.0
    %612 = vmatpush1.xpose.msra.mxu0 %v483
    %613 = vmatprep.subr.mxu0 0.0
    %614 = vmatpush1.xpose.msra.mxu0 %v478
    %615 = vmatprep.subr.mxu0 0.0
    %616 = vmatpush1.xpose.msra.mxu0 %v475
    %617 = vmatprep.subr.mxu0 0.0
    %618 = vmatpush1.xpose.msra.mxu0 %v470
    %619 = vmatprep.subr.mxu0 0.0
    %620 = vmatpush1.xpose.msra.mxu0 %v467
    %621 = vmatprep.subr.mxu0 0.0
    %622 = vmatpush1.xpose.msra.mxu0 %v462
    %623 = vmatprep.subr.mxu0 0.0
    %624 = vmatpush1.xpose.msra.mxu0 %v459
    %625 = vmatprep.subr.mxu0 0.0
    %626 = vmatpush2.xpose.msra.mxu0 0.0
    %627 = vmatprep.subr.mxu0 0.0
    %628 = vmatpush2.xpose.msra.mxu0 0.0
    %629 = vmatprep.subr.mxu0 0.0
    %630 = vmatpush2.xpose.msra.mxu0 0.0
    %631 = vmatprep.subr.mxu0 0.0
    %632 = vmatpush2.xpose.msra.mxu0 0.0
    %633 = vmatprep.subr.mxu0 0.0
    %634 = vmatpush2.xpose.msra.mxu0 0.0
    %635 = vmatprep.subr.mxu0 0.0
    %636 = vmatpush2.xpose.msra.mxu0 0.0
    %637 = vmatprep.subr.mxu0 0.0
    %638 = vmatpush2.xpose.msra.mxu0 0.0
    %639 = vmatprep.subr.mxu0 0.0
    %640 = vmatpush2.xpose.msra.mxu0 0.0
    %641 = vmatprep.subr.mxu0 0.0
    %642 = vmatpush2.xpose.msra.mxu0 0.0
    %643 = vmatprep.subr.mxu0 0.0
    %644 = vmatpush2.xpose.msra.mxu0 0.0
    %645 = vmatprep.subr.mxu0 0.0
    %646 = vmatpush2.xpose.msra.mxu0 0.0
    %647 = vmatprep.subr.mxu0 0.0
    %648 = vmatpush2.xpose.msra.mxu0 0.0
    %649 = vmatprep.subr.mxu0 0.0
    %650 = vmatpush2.xpose.msra.mxu0 0.0
    %651 = vmatprep.subr.mxu0 0.0
    %652 = vmatpush2.xpose.msra.mxu0 0.0
    %653 = vmatprep.subr.mxu0 0.0
    %654 = vmatpush2.xpose.msra.mxu0 0.0
    %655 = vmatprep.subr.mxu0 0.0
    %656 = vmatpush2.xpose.msra.mxu0 0.0
    %657 = vmatprep.mubr.f32.mxu0 0.0
    %658 = vmatmul.mubr.f32.gmra.mxu0 %v521
    %v659 = vpop.f32.mrf.mxu0
    %v660 = vadd.f32 0.0, %v659
    %v661 = vpop.f32.mrf.mxu0
    %662 = vdwg.mxu0
    %v663 = vmul.f32 %v589, 0.125
    %v664 = vmul.f32 %v591, 0.125
    %v665 = vmul.f32 %v660, 0.125
    %v666 = vlaneseq
    %v667 = vand.u32 %v666, 127
    %v668 = vadd.s32 %v667, 128
    %v669 = vadd.s32 %v667, 256
    %s670 = smul.u32 0, 384
    %v671 = vstv %s670
    %v672 = vadd.s32 %v667, %v671
    %v673 = vadd.s32 %v668, %v671
    %v674 = vadd.s32 %v669, %v671
    %vm675 = vcmp.lt.s32.totalorder %v672, 300
    %vm676 = vcmp.lt.s32.totalorder %v673, 300
    %vm677 = vcmp.lt.s32.totalorder %v674, 300
    %v678 = vsel %vm675, %v663, -1e+30
    %v679 = vsel %vm676, %v664, -1e+30
    %v680 = vsel %vm677, %v665, -1e+30
    %v684 = vcombine.low %v678, %v679
    %v686 = vunpack.c.l.s4 1983009808
    %v687 = vunpack.c.0.s8 %v686
    %v688 = vlaneseq
    %v689 = vshrl.u32 %v688, 7
    %v690 = vsub.s32 %v687, %v689
    %v691 = vrot.slane %v684, %v690
    %v693 = vunpack.c.l.s4 1983009808
    %v694 = vunpack.c.0.s8 %v693
    %v695 = vlaneseq
    %v696 = vshrl.u32 %v695, 7
    %v697 = vsub.s32 %v694, %v696
    %v698 = vrot.slane %v680, %v697
    %v699 = vcombine.low %v691, %v698
    %701 = vst [vmem:[%s7] sm:$0x3f] %v699
    %p702 = scmp.eq.s32.totalorder 0, 0
    // Predicated region
    $region30: #{dsmil_forward.4} parent=1 // pred_check
      %p703 = pneg %p702
    $region31: #{dsmil_forward.4} parent=1 // pred_check_branch
      %705 = sbr.rel (%p703) target = $region33
    $region32: #{dsmil_forward.4} parent=1 // pred_region
      %vm706 = vcmask 1024
      %707 = vst.msk [vmem:[%s8] sm:$0x3] %vm706, -1e+30
      %708 = vst.msk [vmem:[%s9] sm:$0x3] %vm706, 0.0
      %709 = vst [vmem:[%s10] sm:$0x3] 0.0
    $region33: #{dsmil_forward.4} parent=1 // pred_fallthru
      _
    %v710 = vld [vmem:[%s8] sm:$0x3]
    %vm711 = vcmask 1041408
    %v712 = vsel %vm711, %v678, -inf
    %v713 = vsel %vm711, %v679, -inf
    %v714 = vsel %vm711, %v680, -inf
    %v715 = vmax.f32 %v712, %v713
    %v716 = vmax.f32 %v715, %v714
    %717 = vmax.xlane.f32.xlu0 %v716
    %v718 = vpop.xlane.xlu0 %717
    %v719 = vmax.f32 %v710, %v718
    %v720 = vsub.f32 %v710, %v719
    %v721 = vmul.f32 %v720, 1.442695
    %v722 = vpow.pop %v721
    %724 = vset.pattern.permute.xlu0 0
    %725 = vperm.xlu0 %724, %v719
    %v726 = vpop.permute.xlu0 %725
    %v728 = vsub.f32 %v678, %v726
    %v729 = vsub.f32 %v679, %v726
    %v730 = vsub.f32 %v680, %v726
    %v731 = vmul.f32 %v728, 1.442695
    %v732 = vpow.pop %v731
    %v733 = vmul.f32 %v729, 1.442695
    %v734 = vpow.pop %v733
    %v735 = vmul.f32 %v730, 1.442695
    %v736 = vpow.pop %v735
    %v737 = vld [vmem:[%s9] sm:$0x3]
    %v738 = vmul.f32 %v722, %v737
    %v739 = vsel %vm711, %v732, 0.0
    %v740 = vsel %vm711, %v734, 0.0
    %v741 = vadd.f32 %v739, %v740
    %v742 = vsel %vm711, %v736, 0.0
    %v743 = vadd.f32 %v741, %v742
    %744 = vadd.xlane.f32.xlu0 %v743
    %v745 = vpop.xlane.xlu0 %744
    %v746 = vadd.f32 %v738, %v745
    %vm747 = vcmask 1024
    %748 = vst.msk [vmem:[%s9] sm:$0x3] %vm747, %v746
    %v749 = vld [vmem:[%s10] sm:$0x3]
    %751 = vset.pattern.permute.xlu0 0
    %752 = vperm.xlu0 %751, %v722
    %v753 = vpop.permute.xlu0 %752
    %v755 = vmul.f32 %v753, %v749
    %756 = vmatprep.subr.mxu0 0.0
    %757 = vmatpush1.msra.mxu0 %v390
    %758 = vmatprep.subr.mxu0 0.0
    %759 = vmatpush1.msra.mxu0 %v387
    %760 = vmatprep.subr.mxu0 0.0
    %761 = vmatpush1.msra.mxu0 %v382
    %762 = vmatprep.subr.mxu0 0.0
    %763 = vmatpush1.msra.mxu0 %v379
    %764 = vmatprep.subr.mxu0 0.0
    %765 = vmatpush1.msra.mxu0 %v374
    %766 = vmatprep.subr.mxu0 0.0
    %767 = vmatpush1.msra.mxu0 %v371
    %768 = vmatprep.subr.mxu0 0.0
    %769 = vmatpush1.msra.mxu0 %v366
    %770 = vmatprep.subr.mxu0 0.0
    %771 = vmatpush1.msra.mxu0 %v363
    %772 = vmatprep.subr.mxu0 0.0
    %773 = vmatpush1.msra.mxu0 %v358
    %774 = vmatprep.subr.mxu0 0.0
    %775 = vmatpush1.msra.mxu0 %v355
    %776 = vmatprep.subr.mxu0 0.0
    %777 = vmatpush1.msra.mxu0 %v350
    %778 = vmatprep.subr.mxu0 0.0
    %779 = vmatpush1.msra.mxu0 %v347
    %780 = vmatprep.subr.mxu0 0.0
    %781 = vmatpush1.msra.mxu0 %v342
    %782 = vmatprep.subr.mxu0 0.0
    %783 = vmatpush1.msra.mxu0 %v339
    %784 = vmatprep.subr.mxu0 0.0
    %785 = vmatpush1.msra.mxu0 %v334
    %786 = vmatprep.subr.mxu0 0.0
    %787 = vmatpush1.msra.mxu0 %v331
    %788 = vmatprep.subr.mxu0 0.0
    %789 = vmatpush2.msra.mxu0 %v454
    %790 = vmatprep.subr.mxu0 0.0
    %791 = vmatpush2.msra.mxu0 %v451
    %792 = vmatprep.subr.mxu0 0.0
    %793 = vmatpush2.msra.mxu0 %v446
    %794 = vmatprep.subr.mxu0 0.0
    %795 = vmatpush2.msra.mxu0 %v443
    %796 = vmatprep.subr.mxu0 0.0
    %797 = vmatpush2.msra.mxu0 %v438
    %798 = vmatprep.subr.mxu0 0.0
    %799 = vmatpush2.msra.mxu0 %v435
    %800 = vmatprep.subr.mxu0 0.0
    %801 = vmatpush2.msra.mxu0 %v430
    %802 = vmatprep.subr.mxu0 0.0
    %803 = vmatpush2.msra.mxu0 %v427
    %804 = vmatprep.subr.mxu0 0.0
    %805 = vmatpush2.msra.mxu0 %v422
    %806 = vmatprep.subr.mxu0 0.0
    %807 = vmatpush2.msra.mxu0 %v419
    %808 = vmatprep.subr.mxu0 0.0
    %809 = vmatpush2.msra.mxu0 %v414
    %810 = vmatprep.subr.mxu0 0.0
    %811 = vmatpush2.msra.mxu0 %v411
    %812 = vmatprep.subr.mxu0 0.0
    %813 = vmatpush2.msra.mxu0 %v406
    %814 = vmatprep.subr.mxu0 0.0
    %815 = vmatpush2.msra.mxu0 %v403
    %816 = vmatprep.subr.mxu0 0.0
    %817 = vmatpush2.msra.mxu0 %v398
    %818 = vmatprep.subr.mxu0 0.0
    %819 = vmatpush2.msra.mxu0 %v395
    %820 = vmatprep.mubr.f32.mxu0 %v734
    %821 = vmatmul.mubr.f32.gmra.mxu0 %v732
    %v822 = vpop.f32.mrf.mxu0
    %v823 = vadd.f32 0.0, %v822
    %v824 = vpop.f32.mrf.mxu0
    %825 = vdwg.mxu0
    %826 = vmatprep.subr.mxu0 0.0
    %827 = vmatpush1.msra.mxu0 %v518
    %828 = vmatprep.subr.mxu0 0.0
    %829 = vmatpush1.msra.mxu0 %v515
    %830 = vmatprep.subr.mxu0 0.0
    %831 = vmatpush1.msra.mxu0 %v510
    %832 = vmatprep.subr.mxu0 0.0
    %833 = vmatpush1.msra.mxu0 %v507
    %834 = vmatprep.subr.mxu0 0.0
    %835 = vmatpush1.msra.mxu0 %v502
    %836 = vmatprep.subr.mxu0 0.0
    %837 = vmatpush1.msra.mxu0 %v499
    %838 = vmatprep.subr.mxu0 0.0
    %839 = vmatpush1.msra.mxu0 %v494
    %840 = vmatprep.subr.mxu0 0.0
    %841 = vmatpush1.msra.mxu0 %v491
    %842 = vmatprep.subr.mxu0 0.0
    %843 = vmatpush1.msra.mxu0 %v486
    %844 = vmatprep.subr.mxu0 0.0
    %845 = vmatpush1.msra.mxu0 %v483
    %846 = vmatprep.subr.mxu0 0.0
    %847 = vmatpush1.msra.mxu0 %v478
    %848 = vmatprep.subr.mxu0 0.0
    %849 = vmatpush1.msra.mxu0 %v475
    %850 = vmatprep.subr.mxu0 0.0
    %851 = vmatpush1.msra.mxu0 %v470
    %852 = vmatprep.subr.mxu0 0.0
    %853 = vmatpush1.msra.mxu0 %v467
    %854 = vmatprep.subr.mxu0 0.0
    %855 = vmatpush1.msra.mxu0 %v462
    %856 = vmatprep.subr.mxu0 0.0
    %857 = vmatpush1.msra.mxu0 %v459
    %858 = vmatprep.subr.mxu0 0.0
    %859 = vmatpush2.msra.mxu0 0.0
    %860 = vmatprep.subr.mxu0 0.0
    %861 = vmatpush2.msra.mxu0 0.0
    %862 = vmatprep.subr.mxu0 0.0
    %863 = vmatpush2.msra.mxu0 0.0
    %864 = vmatprep.subr.mxu0 0.0
    %865 = vmatpush2.msra.mxu0 0.0
    %866 = vmatprep.subr.mxu0 0.0
    %867 = vmatpush2.msra.mxu0 0.0
    %868 = vmatprep.subr.mxu0 0.0
    %869 = vmatpush2.msra.mxu0 0.0
    %870 = vmatprep.subr.mxu0 0.0
    %871 = vmatpush2.msra.mxu0 0.0
    %872 = vmatprep.subr.mxu0 0.0
    %873 = vmatpush2.msra.mxu0 0.0
    %874 = vmatprep.subr.mxu0 0.0
    %875 = vmatpush2.msra.mxu0 0.0
    %876 = vmatprep.subr.mxu0 0.0
    %877 = vmatpush2.msra.mxu0 0.0
    %878 = vmatprep.subr.mxu0 0.0
    %879 = vmatpush2.msra.mxu0 0.0
    %880 = vmatprep.subr.mxu0 0.0
    %881 = vmatpush2.msra.mxu0 0.0
    %882 = vmatprep.subr.mxu0 0.0
    %883 = vmatpush2.msra.mxu0 0.0
    %884 = vmatprep.subr.mxu0 0.0
    %885 = vmatpush2.msra.mxu0 0.0
    %886 = vmatprep.subr.mxu0 0.0
    %887 = vmatpush2.msra.mxu0 0.0
    %888 = vmatprep.subr.mxu0 0.0
    %889 = vmatpush2.msra.mxu0 0.0
    %890 = vmatprep.mubr.f32.mxu0 0.0
    %891 = vmatmul.mubr.f32.gmra.mxu0 %v736
    %v892 = vpop.f32.mrf.mxu0
    %v893 = vadd.f32 %v823, %v892
    %v894 = vpop.f32.mrf.mxu0
    %895 = vdwg.mxu0
    %v896 = vadd.f32 %v755, %v893
    %897 = vst [vmem:[%s10] sm:$0x3] %v896
    %898 = vst.msk [vmem:[%s8] sm:$0x3] %vm747, %v719
    // Predicated region
    $region34: #{dsmil_forward.4} parent=1 // pred_check
      %p899 = pneg %p702
    $region35: #{dsmil_forward.4} parent=1 // pred_check_branch
      %901 = sbr.rel (%p899) target = $region37
    $region36: #{dsmil_forward.4} parent=1 // pred_region
      %v902 = vld [vmem:[%s10] sm:$0x3]
      %v903 = vld [vmem:[%s9] sm:$0x3]
      %v904 = vrcp.pop %v903
      %v905 = vmul.f32 1.0, %v904
      %907 = vset.pattern.permute.xlu0 0
      %908 = vperm.xlu0 %907, %v905
      %v909 = vpop.permute.xlu0 %908
      %v911 = vmul.f32 %v902, %v909
      %912 = vst [vmem:[%s10] sm:$0x3] %v911
      %v914 = vrot.slane %v911, 1
      %v916 = vld [vmem:[%s4] sm:$0xff]
      %v917 = vld [vmem:[%s4 + $0x8] sm:$0xff]
      %v918 = vld [vmem:[%s4 + $0x10] sm:$0xff]
      %v919 = vld [vmem:[%s4 + $0x18] sm:$0xff]
      %v920 = vld [vmem:[%s4 + $0x20] sm:$0xff]
      %v921 = vld [vmem:[%s4 + $0x28] sm:$0xff]
      %v922 = vld [vmem:[%s4 + $0x30] sm:$0xff]
      %v923 = vld [vmem:[%s4 + $0x38] sm:$0xff]
      %v924 = vld [vmem:[%s4 + $0x40] sm:$0xff]
      %v925 = vld [vmem:[%s4 + $0x48] sm:$0xff]
      %v926 = vld [vmem:[%s4 + $0x50] sm:$0xff]
      %v927 = vld [vmem:[%s4 + $0x58] sm:$0xff]
      %v928 = vld [vmem:[%s4 + $0x60] sm:$0xff]
      %v929 = vld [vmem:[%s4 + $0x68] sm:$0xff]
      %v930 = vld [vmem:[%s4 + $0x70] sm:$0xff]
      %v931 = vld [vmem:[%s4 + $0x78] sm:$0xff]
      %v932 = vld [vmem:[%s4 + $0x80] sm:$0xff]
      %v933 = vld [vmem:[%s4 + $0x88] sm:$0xff]
      %v934 = vld [vmem:[%s4 + $0x90] sm:$0xff]
      %v935 = vld [vmem:[%s4 + $0x98] sm:$0xff]
      %v936 = vld [vmem:[%s4 + $0xa0] sm:$0xff]
      %v937 = vld [vmem:[%s4 + $0xa8] sm:$0xff]
      %v938 = vld [vmem:[%s4 + $0xb0] sm:$0xff]
      %v939 = vld [vmem:[%s4 + $0xb8] sm:$0xff]
      %v940 = vld [vmem:[%s4 + $0xc0] sm:$0xff]
      %v941 = vld [vmem:[%s4 + $0xc8] sm:$0xff]
      %v942 = vld [vmem:[%s4 + $0xd0] sm:$0xff]
      %v943 = vld [vmem:[%s4 + $0xd8] sm:$0xff]
      %v944 = vld [vmem:[%s4 + $0xe0] sm:$0xff]
      %v945 = vld [vmem:[%s4 + $0xe8] sm:$0xff]
      %v946 = vld [vmem:[%s4 + $0xf0] sm:$0xff]
      %v947 = vld [vmem:[%s4 + $0xf8] sm:$0xff]
      %v948 = vld [vmem:[%s5] sm:$0x1]
      %949 = vmatprep.subr.mxu0 0.0
      %950 = vmatpush1.msra.mxu0 %v931
      %951 = vmatprep.subr.mxu0 0.0
      %952 = vmatpush1.msra.mxu0 %v930
      %953 = vmatprep.subr.mxu0 0.0
      %954 = vmatpush1.msra.mxu0 %v929
      %955 = vmatprep.subr.mxu0 0.0
      %956 = vmatpush1.msra.mxu0 %v928
      %957 = vmatprep.subr.mxu0 0.0
      %958 = vmatpush1.msra.mxu0 %v927
      %959 = vmatprep.subr.mxu0 0.0
      %960 = vmatpush1.msra.mxu0 %v926
      %961 = vmatprep.subr.mxu0 0.0
      %962 = vmatpush1.msra.mxu0 %v925
      %963 = vmatprep.subr.mxu0 0.0
      %964 = vmatpush1.msra.mxu0 %v924
      %965 = vmatprep.subr.mxu0 0.0
      %966 = vmatpush1.msra.mxu0 %v923
      %967 = vmatprep.subr.mxu0 0.0
      %968 = vmatpush1.msra.mxu0 %v922
      %969 = vmatprep.subr.mxu0 0.0
      %970 = vmatpush1.msra.mxu0 %v921
      %971 = vmatprep.subr.mxu0 0.0
      %972 = vmatpush1.msra.mxu0 %v920
      %973 = vmatprep.subr.mxu0 0.0
      %974 = vmatpush1.msra.mxu0 %v919
      %975 = vmatprep.subr.mxu0 0.0
      %976 = vmatpush1.msra.mxu0 %v918
      %977 = vmatprep.subr.mxu0 0.0
      %978 = vmatpush1.msra.mxu0 %v917
      %979 = vmatprep.subr.mxu0 0.0
      %980 = vmatpush1.msra.mxu0 %v916
      %981 = vmatprep.subr.mxu0 0.0
      %982 = vmatpush2.msra.mxu0 %v947
      %983 = vmatprep.subr.mxu0 0.0
      %984 = vmatpush2.msra.mxu0 %v946
      %985 = vmatprep.subr.mxu0 0.0
      %986 = vmatpush2.msra.mxu0 %v945
      %987 = vmatprep.subr.mxu0 0.0
      %988 = vmatpush2.msra.mxu0 %v944
      %989 = vmatprep.subr.mxu0 0.0
      %990 = vmatpush2.msra.mxu0 %v943
      %991 = vmatprep.subr.mxu0 0.0
      %992 = vmatpush2.msra.mxu0 %v942
      %993 = vmatprep.subr.mxu0 0.0
      %994 = vmatpush2.msra.mxu0 %v941
      %995 = vmatprep.subr.mxu0 0.0
      %996 = vmatpush2.msra.mxu0 %v940
      %997 = vmatprep.subr.mxu0 0.0
      %998 = vmatpush2.msra.mxu0 %v939
      %999 = vmatprep.subr.mxu0 0.0
      %1000 = vmatpush2.msra.mxu0 %v938
      %1001 = vmatprep.subr.mxu0 0.0
      %1002 = vmatpush2.msra.mxu0 %v937
      %1003 = vmatprep.subr.mxu0 0.0
      %1004 = vmatpush2.msra.mxu0 %v936
      %1005 = vmatprep.subr.mxu0 0.0
      %1006 = vmatpush2.msra.mxu0 %v935
      %1007 = vmatprep.subr.mxu0 0.0
      %1008 = vmatpush2.msra.mxu0 %v934
      %1009 = vmatprep.subr.mxu0 0.0
      %1010 = vmatpush2.msra.mxu0 %v933
      %1011 = vmatprep.subr.mxu0 0.0
      %1012 = vmatpush2.msra.mxu0 %v932
      %1013 = vmatprep.mubr.f32.mxu0 %v914
      %1014 = vmatmul.mubr.f32.gmra.mxu0 %v911
      %v1015 = vpop.f32.mrf.mxu0
      %v1016 = vadd.f32 %v948, %v1015
      %v1017 = vpop.f32.mrf.mxu0
      %1018 = vdwg.mxu0
      %v1019 = vld [vmem:[%s6] sm:$0x1]
      %v1020 = vadd.f32 %v1016, %v1019
      %v1021 = vmul.f32 %v1020, 0.5
      %vm1022 = vcmask 8192
      %1023 = vst.msk [vmem:[#allocation2] sm:$0x1] %vm1022, %v1021
    $region37: #{dsmil_forward.4} parent=1 // pred_fallthru
      _
    // Predicated region
    $region38: #{dsmil_forward.4} parent=1 // pred_check
      _
    $region39: #{dsmil_forward.4} parent=1 // pred_check_branch
      %1025 = sbr.rel (0) target = $region41
    $region40: #{dsmil_forward.4} parent=1 // pred_region
      _
    $region41: #{dsmil_forward.4} parent=1 // pred_fallthru
      _
    // Predicated region
    $region42: #{dsmil_forward.4} parent=1 // pred_check
      _
    $region43: #{dsmil_forward.4} parent=1 // pred_check_branch
      %1027 = sbr.rel (0) target = $region45
    $region44: #{dsmil_forward.4} parent=1 // pred_region
      _
    $region45: #{dsmil_forward.4} parent=1 // pred_fallthru
      _
    // Predicated region
    $region46: #{dsmil_forward.4} parent=1 // pred_check
      _
    $region47: #{dsmil_forward.4} parent=1 // pred_check_branch
      %1029 = sbr.rel (0) target = $region49
    $region48: #{dsmil_forward.4} parent=1 // pred_region
      _
    $region49: #{dsmil_forward.4} parent=1 // pred_fallthru
      _
    // Predicated region
    $region50: #{dsmil_forward.4} parent=1 // pred_check
      _
    $region51: #{dsmil_forward.4} parent=1 // pred_check_branch
      %1031 = sbr.rel (0) target = $region53
    $region52: #{dsmil_forward.4} parent=1 // pred_region
      _
    $region53: #{dsmil_forward.4} parent=1 // pred_fallthru
      _
    // Predicated region
    $region54: #{dsmil_forward.4} parent=1 // pred_check
      _
    $region55: #{dsmil_forward.4} parent=1 // pred_check_branch
      %1033 = sbr.rel (0) target = $region57
    $region56: #{dsmil_forward.4} parent=1 // pred_region
      %s1035 = ssub.s32 16, 16
      %1036 = vsyncadd [#allocation3], %s1035
      %s1038 = sshll.u32 [#allocation2], 4
      %s1039 = int_to_ptr.vmem [resolvable:$true] %s1038
      %1041 = dma.vmem_to_hbm [thread:$0]  %s1039, 16, %s11, [#allocation3]
    $region57: #{dsmil_forward.4} parent=1 // pred_fallthru
      _
    // Predicated region
    $region58: #{dsmil_forward.4} parent=1 // pred_check
      _
    $region59: #{dsmil_forward.4} parent=1 // pred_check_branch
      %1043 = sbr.rel (0) target = $region61
    $region60: #{dsmil_forward.4} parent=1 // pred_region
      _
    $region61: #{dsmil_forward.4} parent=1 // pred_fallthru
      _
    // Predicated region
    $region62: #{dsmil_forward.4} parent=1 // pred_check
      _
    $region63: #{dsmil_forward.4} parent=1 // pred_check_branch
      %1045 = sbr.rel (0) target = $region65
    $region64: #{dsmil_forward.4} parent=1 // pred_region
      _
    $region65: #{dsmil_forward.4} parent=1 // pred_fallthru
      _
    // Predicated region
    $region66: #{dsmil_forward.4} parent=1 // pred_check
      _
    $region67: #{dsmil_forward.4} parent=1 // pred_check_branch
      %1047 = sbr.rel (0) target = $region69
    $region68: #{dsmil_forward.4} parent=1 // pred_region
      _
    $region69: #{dsmil_forward.4} parent=1 // pred_fallthru
      _
    // Predicated region
    $region70: #{dsmil_forward.4} parent=1 // pred_check
      _
    $region71: #{dsmil_forward.4} parent=1 // pred_check_branch
      %1049 = sbr.rel (0) target = $region73
    $region72: #{dsmil_forward.4} parent=1 // pred_region
      _
    $region73: #{dsmil_forward.4} parent=1 // pred_fallthru
      _
    // Predicated region
    $region74: #{dsmil_forward.4} parent=1 // pred_check
      _
    $region75: #{dsmil_forward.4} parent=1 // pred_check_branch
      %1051 = sbr.rel (0) target = $region77
    $region76: #{dsmil_forward.4} parent=1 // pred_region
      %1052 = dma.done [#allocation3], 16
    $region77: #{dsmil_forward.4} parent=1 // pred_fallthru
      _
    %1053 = vsyncpa [#allocation3], 1

</llo_original>
